<compile_context>
chip_gen: v7x
topology: tpu7x:2x2x1
jax: 0.10.0
libtpu: 0.0.40
codegen_flags: <defaults>
</compile_context>

<pallas_src>
import numpy as np
import jax
import jax.numpy as jnp
from jax.experimental import pallas as pl
from jax.experimental.pallas import tpu as pltpu

_EPS = 1e-5
_F32_MIN = float(np.finfo(np.float32).min)


def _round_up(x, m):
    return ((x + m - 1) // m) * m


def _pick_row_tile(R, widths, weight_bytes, target=512,
                   budget_bytes=12 * 2 ** 20):
    """Largest row tile that keeps the fused kernel inside scoped VMEM.

    `widths` are all activation widths (input + every block output) flowing
    through the fused kernel; `weight_bytes` is the total size of all weight /
    scale / shift operands (assumed double-buffered, though their block index
    is constant so they are only fetched once).
    """
    k_in, k_out1, k_out2 = widths[0], widths[-1], widths[-1]
    w_max = max(widths)
    # per-row bytes: double-buffered I/O tiles + ~3 live intermediates.
    per_row = 4 * (2 * (k_in + k_out1 + k_out2) + 3 * w_max)
    avail = max(budget_bytes - 2 * weight_bytes, 2 ** 20)
    rt = min(target, _round_up(R, 8))
    rt = max(8, (rt // 8) * 8)
    while rt > 8 and rt * per_row > avail:
        rt = max(8, ((rt // 2) // 8) * 8)
    return rt


# ----------------------------------------------------------------------------
# Pallas kernels
# ----------------------------------------------------------------------------

def make_fused_stream_kernel(n_main, n_branch):
    """Fused kernel: data_bn -> main stream -> branch1 / branch2.

    Inputs (in order): x tile, bn_scale, bn_shift, then for every block
    (main..., branch1..., branch2...) the triple (wk, scale, shift).
    Outputs: branch1 tile, branch2 tile.
    """
    n_blocks = n_main + 2 * n_branch

    def kernel(*refs):
        idx = 0
        x_ref = refs[idx]; idx += 1
        bn_s_ref = refs[idx]; idx += 1
        bn_b_ref = refs[idx]; idx += 1
        p_refs = refs[idx: idx + 3 * n_blocks]; idx += 3 * n_blocks
        o1_ref, o2_ref = refs[idx], refs[idx + 1]

        def block(h, j):
            # One MXU matmul against kron(A^T, W); lane-dense output.
            wk = p_refs[3 * j][...]
            sc = p_refs[3 * j + 1][...]
            sh = p_refs[3 * j + 2][...]
            y = jnp.dot(h, wk, preferred_element_type=jnp.float32)
            return jnp.maximum(y * sc + sh, 0.0)       # folded BN + ReLU

        # data_bn (eval mode, folded) fused as prologue.
        h = x_ref[...] * bn_s_ref[...] + bn_b_ref[...]
        for j in range(n_main):
            h = block(h, j)
        h_main = h                                      # stays in VMEM

        h1 = h_main
        for j in range(n_main, n_main + n_branch):
            h1 = block(h1, j)
        o1_ref[...] = h1.astype(o1_ref.dtype)

        h2 = h_main
        for j in range(n_main + n_branch, n_main + 2 * n_branch):
            h2 = block(h2, j)
        o2_ref[...] = h2.astype(o2_ref.dtype)

    return kernel


def _pool_spp_kernel(x1_ref, x2_ref, m2_ref, m3_ref, o_ref):
    # x1/x2: (1, T, V, C) per sample; m2/m3: (P, V) partition masks.
    # Fuses temporal max pooling + SemanticPyramidPooling for both branches
    # and emits the already-transposed, concatenated (1, C, P2+P3) slab.
    def branch(x_ref, m_ref):
        pooled = jnp.max(x_ref[...], axis=1)[0]                # (V, C)
        m = m_ref[...]                                         # (P, V)
        masked = jnp.where(m[:, :, None] > 0.5, pooled[None, :, :], _F32_MIN)
        return jnp.max(masked, axis=1)                         # (P, C)

    s = jnp.concatenate([branch(x1_ref, m2_ref),
                         branch(x2_ref, m3_ref)], axis=0)      # (P2+P3, C)
    o_ref[...] = jnp.transpose(s, (1, 0))[None].astype(o_ref.dtype)


# ----------------------------------------------------------------------------
# Kernel wrappers
# ----------------------------------------------------------------------------

def fused_stream(x_flat, bn_scale, bn_shift, main_blocks, br1_blocks,
                 br2_blocks, row_tile=512):
    """Whole GagStream block stack on flat (R, V*Cin) -> two (R, V*Cb)."""
    R, K0 = x_flat.shape
    blocks = list(main_blocks) + list(br1_blocks) + list(br2_blocks)
    widths = [K0] + [b["wk"].shape[1] for b in blocks]
    Nout = br1_blocks[-1]["wk"].shape[1] if br1_blocks else widths[-1]
    weight_bytes = sum(b["wk"].size * 4 + 2 * b["wk"].shape[1] * 4
                       for b in blocks)

    rt = _pick_row_tile(R, widths, weight_bytes, target=row_tile)
    R_pad = _round_up(R, rt)
    if R_pad != R:
        x_flat = jnp.pad(x_flat, ((0, R_pad - R), (0, 0)))
    grid = (R_pad // rt,)

    in_specs = [
        pl.BlockSpec((rt, K0), lambda i: (i, 0)),
        pl.BlockSpec((1, K0), lambda i: (0, 0)),
        pl.BlockSpec((1, K0), lambda i: (0, 0)),
    ]
    operands = [x_flat, bn_scale.reshape(1, K0), bn_shift.reshape(1, K0)]
    for b in blocks:
        Kb, Nb = b["wk"].shape
        in_specs.append(pl.BlockSpec((Kb, Nb), lambda i: (0, 0)))
        in_specs.append(pl.BlockSpec((1, Nb), lambda i: (0, 0)))
        in_specs.append(pl.BlockSpec((1, Nb), lambda i: (0, 0)))
        operands += [b["wk"], b["scale"].reshape(1, Nb),
                     b["shift"].reshape(1, Nb)]

    o_spec = pl.BlockSpec((rt, Nout), lambda i: (i, 0))
    kernel = make_fused_stream_kernel(len(main_blocks), len(br1_blocks))

    out1, out2 = pl.pallas_call(
        kernel,
        out_shape=(jax.ShapeDtypeStruct((R_pad, Nout), jnp.float32),
                   jax.ShapeDtypeStruct((R_pad, Nout), jnp.float32)),
        grid=grid,
        in_specs=in_specs,
        out_specs=[o_spec, o_spec],
        compiler_params=pltpu.CompilerParams(
            dimension_semantics=("parallel",)),
    )(*operands)

    if R_pad != R:
        out1, out2 = out1[:R], out2[:R]
    return out1, out2


def pooled_spp(x1, x2, mask2, mask3):
    """Temporal max + SPP (both branches) fused; returns (NM, C, P2+P3)."""
    NM, T, V, C = x1.shape
    P2, P3 = mask2.shape[0], mask3.shape[0]
    return pl.pallas_call(
        _pool_spp_kernel,
        out_shape=jax.ShapeDtypeStruct((NM, C, P2 + P3), jnp.float32),
        grid=(NM,),
        in_specs=[
            pl.BlockSpec((1, T, V, C), lambda i: (i, 0, 0, 0)),
            pl.BlockSpec((1, T, V, C), lambda i: (i, 0, 0, 0)),
            pl.BlockSpec((P2, V), lambda i: (0, 0)),
            pl.BlockSpec((P3, V), lambda i: (0, 0)),
        ],
        out_specs=pl.BlockSpec((1, C, P2 + P3), lambda i: (i, 0, 0)),
        compiler_params=pltpu.CompilerParams(
            dimension_semantics=("parallel",)),
    )(x1, x2, mask2, mask3)


# ----------------------------------------------------------------------------
# Parameter construction (deterministic, synthetic)
# ----------------------------------------------------------------------------

def build_adjacency(V):
    # simple chain graph with self-loops, row-normalized: D^-1 (A + I)
    A = np.zeros((V, V), dtype=np.float32)
    for i in range(V - 1):
        A[i, i + 1] = 1.0
        A[i + 1, i] = 1.0
    A += np.eye(V, dtype=np.float32)
    A = A / A.sum(axis=1, keepdims=True)
    return jnp.asarray(A)


def build_part_mask(V, parts):
    m = np.zeros((len(parts), V), dtype=np.float32)
    for p, idxs in enumerate(parts):
        m[p, idxs] = 1.0
    return jnp.asarray(m)


def make_block_params(key, cin, cout, a_agg, V):
    # TODO(synk): GagBasicBlock / GagBlock internals (part-aware attention /
    # embedding / temporal conv) are not in the provided source; approximated
    # as standard ST-GCN graph conv (A @ X @ W) + folded BN + ReLU.
    w = jax.random.normal(key, (cin, cout), dtype=jnp.float32) / np.sqrt(cin)
    gamma = 1.0 + 0.01 * jnp.arange(cout, dtype=jnp.float32)
    beta = 0.01 * jnp.arange(cout, dtype=jnp.float32)
    run_mean = jnp.zeros((cout,), jnp.float32)
    run_var = jnp.ones((cout,), jnp.float32)
    scale = gamma / jnp.sqrt(run_var + _EPS)
    shift = beta - run_mean * scale
    # Fused weight: Wk[v*Cin+c, w*Cout+d] = A[w, v] * W[c, d]  ==  kron(A^T, W)
    wk = jnp.kron(jnp.transpose(a_agg), w)          # (V*Cin, V*Cout)
    return {"wk": wk,
            "scale": jnp.tile(scale, (V,)),         # broadcast per joint
            "shift": jnp.tile(shift, (V,))}


def make_gagstream_params(key, in_c, first_c, share_num, V):
    keys = jax.random.split(key, 8)
    ki = iter(range(8))
    A = build_adjacency(V)
    params = {"V": V}

    # data_bn = BatchNorm1d(first_c * num_point), eval mode, folded.
    # Channel index = v*C + c, matching the flat (V*C) column layout (M == 1).
    Cch = V * first_c
    gamma = 1.0 + 0.02 * jnp.arange(Cch, dtype=jnp.float32)
    beta = -0.01 * jnp.arange(Cch, dtype=jnp.float32)
    run_mean = jnp.zeros((Cch,), jnp.float32)
    run_var = jnp.ones((Cch,), jnp.float32)
    params["bn_scale"] = gamma / jnp.sqrt(run_var + _EPS)
    params["bn_shift"] = beta - run_mean * params["bn_scale"]

    # main stream: first_c -> in_c[1], then in_c[i] -> in_c[i+1]
    main = [make_block_params(keys[next(ki)], first_c, in_c[1], A, V)]
    for i in range(1, share_num):
        main.append(make_block_params(keys[next(ki)], in_c[i], in_c[i + 1], A, V))
    params["main"] = main

    for name in ("parts2_1", "parts2_2"):
        branch = []
        for i in range(share_num, len(in_c) - 1):
            branch.append(
                make_block_params(keys[next(ki)], in_c[i], in_c[i + 1], A, V))
        params[name] = branch

    # TODO(synk): true SemanticPyramidPooling coco joint partitions are not in
    # the provided source; use whole/halves (part=2) and whole/quarters (part=3).
    parts2 = [list(range(V)), list(range(V // 2)), list(range(V // 2, V))]
    parts3 = [list(range(V))] + [list(range(k * V // 4, (k + 1) * V // 4))
                                 for k in range(4)]
    params["mask_p2"] = build_part_mask(V, parts2)
    params["mask_p3"] = build_part_mask(V, parts3)
    return params


# ----------------------------------------------------------------------------
# GagStream forward
# ----------------------------------------------------------------------------

def gag_stream_forward(x, seqL, params):
    # x: (N, C, T, V, M) -- same convention as the PyTorch module.
    N, C, T, V, M = x.shape

    # Channels-last flat layout: rows = (n, m, t), cols = v*C + c (pure view,
    # matches the PyTorch data_bn channel flattening for M == 1).
    xb = jnp.transpose(x, (0, 4, 2, 3, 1)).reshape(N * M * T, V * C)

    # data_bn + main stream + both part branches fused in ONE kernel: all
    # inter-block activations stay in VMEM, only the two branch outputs hit HBM.
    out1, out2 = fused_stream(xb, params["bn_scale"], params["bn_shift"],
                              params["main"], params["parts2_1"],
                              params["parts2_2"])

    Cb = out1.shape[-1] // V
    x1 = out1.reshape(N * M, T, V, Cb)
    x2 = out2.reshape(N * M, T, V, Cb)

    # set pooling: PackSequenceWrapper(torch.max) with seqL=None == max over T.
    # TODO(synk): variable-length (seqL) packed pooling path not implemented.
    return pooled_spp(x1, x2, params["mask_p2"], params["mask_p3"])  # (NM, Cout, P2+P3)


# ----------------------------------------------------------------------------
# Demo
# ----------------------------------------------------------------------------

if __name__ == "__main__":
    key = jax.random.PRNGKey(0)
    k_x, k_p = jax.random.split(key)

    # small, module-consistent shapes
    N, first_c, T, V, M = 2, 2, 8, 16, 1
    in_c = [2, 8, 16, 32]
    share_num = 2

    x = jax.random.normal(k_x, (N, first_c, T, V, M), dtype=jnp.float32)
    params = make_gagstream_params(k_p, in_c, first_c, share_num, V)

    out = gag_stream_forward(x, None, params)
    out = jax.block_until_ready(out)

    P_total = params["mask_p2"].shape[0] + params["mask_p3"].shape[0]
    expected = (N * M, in_c[-1], P_total)
    assert out.shape == expected, (out.shape, expected)
    assert bool(jnp.all(jnp.isfinite(out)))
    print("KERNEL_OK")
</pallas_src>

<mosaic_0001>
module attributes {stable_mosaic.version = 11 : i64} {
  func.func @kernel(%arg0: i32, %arg1: memref<16x32xf32, #tpu.memory_space<vmem>>, %arg2: memref<1x32xf32, #tpu.memory_space<vmem>>, %arg3: memref<1x32xf32, #tpu.memory_space<vmem>>, %arg4: memref<32x128xf32, #tpu.memory_space<vmem>>, %arg5: memref<1x128xf32, #tpu.memory_space<vmem>>, %arg6: memref<1x128xf32, #tpu.memory_space<vmem>>, %arg7: memref<128x256xf32, #tpu.memory_space<vmem>>, %arg8: memref<1x256xf32, #tpu.memory_space<vmem>>, %arg9: memref<1x256xf32, #tpu.memory_space<vmem>>, %arg10: memref<256x512xf32, #tpu.memory_space<vmem>>, %arg11: memref<1x512xf32, #tpu.memory_space<vmem>>, %arg12: memref<1x512xf32, #tpu.memory_space<vmem>>, %arg13: memref<256x512xf32, #tpu.memory_space<vmem>>, %arg14: memref<1x512xf32, #tpu.memory_space<vmem>>, %arg15: memref<1x512xf32, #tpu.memory_space<vmem>>, %arg16: memref<16x512xf32, #tpu.memory_space<vmem>>, %arg17: memref<16x512xf32, #tpu.memory_space<vmem>>) attributes {dimension_semantics = [#tpu.dimension_semantics<parallel>], iteration_bounds = array<i64: 1>, scalar_prefetch = 0 : i64, scratch_operands = 0 : i64, tpu.core_type = #tpu.core_type<tc>, window_params = [{transform_indices = @transform_0, window_bounds = array<i64: 16, 32>}, {pipeline_mode = #tpu.pipeline_mode<synchronous>, transform_indices = @transform_1, window_bounds = array<i64: 1, 32>}, {pipeline_mode = #tpu.pipeline_mode<synchronous>, transform_indices = @transform_2, window_bounds = array<i64: 1, 32>}, {pipeline_mode = #tpu.pipeline_mode<synchronous>, transform_indices = @transform_3, window_bounds = array<i64: 32, 128>}, {pipeline_mode = #tpu.pipeline_mode<synchronous>, transform_indices = @transform_4, window_bounds = array<i64: 1, 128>}, {pipeline_mode = #tpu.pipeline_mode<synchronous>, transform_indices = @transform_5, window_bounds = array<i64: 1, 128>}, {pipeline_mode = #tpu.pipeline_mode<synchronous>, transform_indices = @transform_6, window_bounds = array<i64: 128, 256>}, {pipeline_mode = #tpu.pipeline_mode<synchronous>, transform_indices = @transform_7, window_bounds = array<i64: 1, 256>}, {pipeline_mode = #tpu.pipeline_mode<synchronous>, transform_indices = @transform_8, window_bounds = array<i64: 1, 256>}, {pipeline_mode = #tpu.pipeline_mode<synchronous>, transform_indices = @transform_9, window_bounds = array<i64: 256, 512>}, {pipeline_mode = #tpu.pipeline_mode<synchronous>, transform_indices = @transform_10, window_bounds = array<i64: 1, 512>}, {pipeline_mode = #tpu.pipeline_mode<synchronous>, transform_indices = @transform_11, window_bounds = array<i64: 1, 512>}, {pipeline_mode = #tpu.pipeline_mode<synchronous>, transform_indices = @transform_12, window_bounds = array<i64: 256, 512>}, {pipeline_mode = #tpu.pipeline_mode<synchronous>, transform_indices = @transform_13, window_bounds = array<i64: 1, 512>}, {pipeline_mode = #tpu.pipeline_mode<synchronous>, transform_indices = @transform_14, window_bounds = array<i64: 1, 512>}, {transform_indices = @transform_15, window_bounds = array<i64: 16, 512>}, {transform_indices = @transform_16, window_bounds = array<i64: 16, 512>}]} {
    %c0 = arith.constant 0 : index
    %c0_0 = arith.constant 0 : index
    %0 = vector.load %arg1[%c0, %c0_0] : memref<16x32xf32, #tpu.memory_space<vmem>>, vector<16x32xf32>
    %c0_1 = arith.constant 0 : index
    %c0_2 = arith.constant 0 : index
    %1 = vector.load %arg2[%c0_1, %c0_2] : memref<1x32xf32, #tpu.memory_space<vmem>>, vector<1x32xf32>
    %2 = vector.broadcast %1 : vector<1x32xf32> to vector<16x32xf32>
    %3 = arith.mulf %0, %2 : vector<16x32xf32>
    %c0_3 = arith.constant 0 : index
    %c0_4 = arith.constant 0 : index
    %4 = vector.load %arg3[%c0_3, %c0_4] : memref<1x32xf32, #tpu.memory_space<vmem>>, vector<1x32xf32>
    %5 = vector.broadcast %4 : vector<1x32xf32> to vector<16x32xf32>
    %6 = arith.addf %3, %5 : vector<16x32xf32>
    %c0_5 = arith.constant 0 : index
    %c0_6 = arith.constant 0 : index
    %7 = vector.load %arg4[%c0_5, %c0_6] : memref<32x128xf32, #tpu.memory_space<vmem>>, vector<32x128xf32>
    %c0_7 = arith.constant 0 : index
    %c0_8 = arith.constant 0 : index
    %8 = vector.load %arg5[%c0_7, %c0_8] : memref<1x128xf32, #tpu.memory_space<vmem>>, vector<1x128xf32>
    %c0_9 = arith.constant 0 : index
    %c0_10 = arith.constant 0 : index
    %9 = vector.load %arg6[%c0_9, %c0_10] : memref<1x128xf32, #tpu.memory_space<vmem>>, vector<1x128xf32>
    %cst = arith.constant dense<0.000000e+00> : vector<16x128xf32>
    %10 = tpu.matmul %6, %7, %cst {dimension_numbers = #tpu.dot_dimension_numbers<[1], [0], [0], [1], [0, 0, 1, 1], [], []>} : vector<16x32xf32>, vector<32x128xf32>, vector<16x128xf32> -> vector<16x128xf32>
    %11 = vector.broadcast %8 : vector<1x128xf32> to vector<16x128xf32>
    %12 = arith.mulf %10, %11 : vector<16x128xf32>
    %13 = vector.broadcast %9 : vector<1x128xf32> to vector<16x128xf32>
    %14 = arith.addf %12, %13 : vector<16x128xf32>
    %cst_11 = arith.constant 0.000000e+00 : f32
    %15 = vector.broadcast %cst_11 : f32 to vector<16x128xf32>
    %16 = arith.maximumf %14, %15 : vector<16x128xf32>
    %c0_12 = arith.constant 0 : index
    %c0_13 = arith.constant 0 : index
    %17 = vector.load %arg7[%c0_12, %c0_13] : memref<128x256xf32, #tpu.memory_space<vmem>>, vector<128x256xf32>
    %c0_14 = arith.constant 0 : index
    %c0_15 = arith.constant 0 : index
    %18 = vector.load %arg8[%c0_14, %c0_15] : memref<1x256xf32, #tpu.memory_space<vmem>>, vector<1x256xf32>
    %c0_16 = arith.constant 0 : index
    %c0_17 = arith.constant 0 : index
    %19 = vector.load %arg9[%c0_16, %c0_17] : memref<1x256xf32, #tpu.memory_space<vmem>>, vector<1x256xf32>
    %cst_18 = arith.constant dense<0.000000e+00> : vector<16x256xf32>
    %20 = tpu.matmul %16, %17, %cst_18 {dimension_numbers = #tpu.dot_dimension_numbers<[1], [0], [0], [1], [0, 0, 1, 1], [], []>} : vector<16x128xf32>, vector<128x256xf32>, vector<16x256xf32> -> vector<16x256xf32>
    %21 = vector.broadcast %18 : vector<1x256xf32> to vector<16x256xf32>
    %22 = arith.mulf %20, %21 : vector<16x256xf32>
    %23 = vector.broadcast %19 : vector<1x256xf32> to vector<16x256xf32>
    %24 = arith.addf %22, %23 : vector<16x256xf32>
    %cst_19 = arith.constant 0.000000e+00 : f32
    %25 = vector.broadcast %cst_19 : f32 to vector<16x256xf32>
    %26 = arith.maximumf %24, %25 : vector<16x256xf32>
    %c0_20 = arith.constant 0 : index
    %c0_21 = arith.constant 0 : index
    %27 = vector.load %arg10[%c0_20, %c0_21] : memref<256x512xf32, #tpu.memory_space<vmem>>, vector<256x512xf32>
    %c0_22 = arith.constant 0 : index
    %c0_23 = arith.constant 0 : index
    %28 = vector.load %arg11[%c0_22, %c0_23] : memref<1x512xf32, #tpu.memory_space<vmem>>, vector<1x512xf32>
    %c0_24 = arith.constant 0 : index
    %c0_25 = arith.constant 0 : index
    %29 = vector.load %arg12[%c0_24, %c0_25] : memref<1x512xf32, #tpu.memory_space<vmem>>, vector<1x512xf32>
    %cst_26 = arith.constant dense<0.000000e+00> : vector<16x512xf32>
    %30 = tpu.matmul %26, %27, %cst_26 {dimension_numbers = #tpu.dot_dimension_numbers<[1], [0], [0], [1], [0, 0, 1, 1], [], []>} : vector<16x256xf32>, vector<256x512xf32>, vector<16x512xf32> -> vector<16x512xf32>
    %31 = vector.broadcast %28 : vector<1x512xf32> to vector<16x512xf32>
    %32 = arith.mulf %30, %31 : vector<16x512xf32>
    %33 = vector.broadcast %29 : vector<1x512xf32> to vector<16x512xf32>
    %34 = arith.addf %32, %33 : vector<16x512xf32>
    %cst_27 = arith.constant 0.000000e+00 : f32
    %35 = vector.broadcast %cst_27 : f32 to vector<16x512xf32>
    %36 = arith.maximumf %34, %35 : vector<16x512xf32>
    %c0_28 = arith.constant 0 : index
    %c0_29 = arith.constant 0 : index
    %37 = vector.load %arg16[%c0_28, %c0_29] : memref<16x512xf32, #tpu.memory_space<vmem>>, vector<16x512xf32>
    tpu.vector_store %arg16[%c0_28, %c0_29], %36 {strides = array<i32>} : memref<16x512xf32, #tpu.memory_space<vmem>>, vector<16x512xf32>,
    %c0_30 = arith.constant 0 : index
    %c0_31 = arith.constant 0 : index
    %38 = vector.load %arg13[%c0_30, %c0_31] : memref<256x512xf32, #tpu.memory_space<vmem>>, vector<256x512xf32>
    %c0_32 = arith.constant 0 : index
    %c0_33 = arith.constant 0 : index
    %39 = vector.load %arg14[%c0_32, %c0_33] : memref<1x512xf32, #tpu.memory_space<vmem>>, vector<1x512xf32>
    %c0_34 = arith.constant 0 : index
    %c0_35 = arith.constant 0 : index
    %40 = vector.load %arg15[%c0_34, %c0_35] : memref<1x512xf32, #tpu.memory_space<vmem>>, vector<1x512xf32>
    %cst_36 = arith.constant dense<0.000000e+00> : vector<16x512xf32>
    %41 = tpu.matmul %26, %38, %cst_36 {dimension_numbers = #tpu.dot_dimension_numbers<[1], [0], [0], [1], [0, 0, 1, 1], [], []>} : vector<16x256xf32>, vector<256x512xf32>, vector<16x512xf32> -> vector<16x512xf32>
    %42 = vector.broadcast %39 : vector<1x512xf32> to vector<16x512xf32>
    %43 = arith.mulf %41, %42 : vector<16x512xf32>
    %44 = vector.broadcast %40 : vector<1x512xf32> to vector<16x512xf32>
    %45 = arith.addf %43, %44 : vector<16x512xf32>
    %cst_37 = arith.constant 0.000000e+00 : f32
    %46 = vector.broadcast %cst_37 : f32 to vector<16x512xf32>
    %47 = arith.maximumf %45, %46 : vector<16x512xf32>
    %c0_38 = arith.constant 0 : index
    %c0_39 = arith.constant 0 : index
    %48 = vector.load %arg17[%c0_38, %c0_39] : memref<16x512xf32, #tpu.memory_space<vmem>>, vector<16x512xf32>
    tpu.vector_store %arg17[%c0_38, %c0_39], %47 {strides = array<i32>} : memref<16x512xf32, #tpu.memory_space<vmem>>, vector<16x512xf32>,
    return
  }
  func.func @transform_0(%arg0: i32) -> (i32, i32) {
    %c0_i32 = arith.constant 0 : i32
    %c0_i32_0 = arith.constant 0 : i32
    return %arg0, %c0_i32 : i32, i32
  }
  func.func @transform_1(%arg0: i32) -> (i32, i32) {
    %c0_i32 = arith.constant 0 : i32
    %c0_i32_0 = arith.constant 0 : i32
    %c0_i32_1 = arith.constant 0 : i32
    return %c0_i32, %c0_i32_0 : i32, i32
  }
  func.func @transform_2(%arg0: i32) -> (i32, i32) {
    %c0_i32 = arith.constant 0 : i32
    %c0_i32_0 = arith.constant 0 : i32
    %c0_i32_1 = arith.constant 0 : i32
    return %c0_i32, %c0_i32_0 : i32, i32
  }
  func.func @transform_3(%arg0: i32) -> (i32, i32) {
    %c0_i32 = arith.constant 0 : i32
    %c0_i32_0 = arith.constant 0 : i32
    %c0_i32_1 = arith.constant 0 : i32
    return %c0_i32, %c0_i32_0 : i32, i32
  }
  func.func @transform_4(%arg0: i32) -> (i32, i32) {
    %c0_i32 = arith.constant 0 : i32
    %c0_i32_0 = arith.constant 0 : i32
    %c0_i32_1 = arith.constant 0 : i32
    return %c0_i32, %c0_i32_0 : i32, i32
  }
  func.func @transform_5(%arg0: i32) -> (i32, i32) {
    %c0_i32 = arith.constant 0 : i32
    %c0_i32_0 = arith.constant 0 : i32
    %c0_i32_1 = arith.constant 0 : i32
    return %c0_i32, %c0_i32_0 : i32, i32
  }
  func.func @transform_6(%arg0: i32) -> (i32, i32) {
    %c0_i32 = arith.constant 0 : i32
    %c0_i32_0 = arith.constant 0 : i32
    %c0_i32_1 = arith.constant 0 : i32
    return %c0_i32, %c0_i32_0 : i32, i32
  }
  func.func @transform_7(%arg0: i32) -> (i32, i32) {
    %c0_i32 = arith.constant 0 : i32
    %c0_i32_0 = arith.constant 0 : i32
    %c0_i32_1 = arith.constant 0 : i32
    return %c0_i32, %c0_i32_0 : i32, i32
  }
  func.func @transform_8(%arg0: i32) -> (i32, i32) {
    %c0_i32 = arith.constant 0 : i32
    %c0_i32_0 = arith.constant 0 : i32
    %c0_i32_1 = arith.constant 0 : i32
    return %c0_i32, %c0_i32_0 : i32, i32
  }
  func.func @transform_9(%arg0: i32) -> (i32, i32) {
    %c0_i32 = arith.constant 0 : i32
    %c0_i32_0 = arith.constant 0 : i32
    %c0_i32_1 = arith.constant 0 : i32
    return %c0_i32, %c0_i32_0 : i32, i32
  }
  func.func @transform_10(%arg0: i32) -> (i32, i32) {
    %c0_i32 = arith.constant 0 : i32
    %c0_i32_0 = arith.constant 0 : i32
    %c0_i32_1 = arith.constant 0 : i32
    return %c0_i32, %c0_i32_0 : i32, i32
  }
  func.func @transform_11(%arg0: i32) -> (i32, i32) {
    %c0_i32 = arith.constant 0 : i32
    %c0_i32_0 = arith.constant 0 : i32
    %c0_i32_1 = arith.constant 0 : i32
    return %c0_i32, %c0_i32_0 : i32, i32
  }
  func.func @transform_12(%arg0: i32) -> (i32, i32) {
    %c0_i32 = arith.constant 0 : i32
    %c0_i32_0 = arith.constant 0 : i32
    %c0_i32_1 = arith.constant 0 : i32
    return %c0_i32, %c0_i32_0 : i32, i32
  }
  func.func @transform_13(%arg0: i32) -> (i32, i32) {
    %c0_i32 = arith.constant 0 : i32
    %c0_i32_0 = arith.constant 0 : i32
    %c0_i32_1 = arith.constant 0 : i32
    return %c0_i32, %c0_i32_0 : i32, i32
  }
  func.func @transform_14(%arg0: i32) -> (i32, i32) {
    %c0_i32 = arith.constant 0 : i32
    %c0_i32_0 = arith.constant 0 : i32
    %c0_i32_1 = arith.constant 0 : i32
    return %c0_i32, %c0_i32_0 : i32, i32
  }
  func.func @transform_15(%arg0: i32) -> (i32, i32) {
    %c0_i32 = arith.constant 0 : i32
    %c0_i32_0 = arith.constant 0 : i32
    return %arg0, %c0_i32 : i32, i32
  }
  func.func @transform_16(%arg0: i32) -> (i32, i32) {
    %c0_i32 = arith.constant 0 : i32
    %c0_i32_0 = arith.constant 0 : i32
    return %arg0, %c0_i32 : i32, i32
  }
}

</mosaic_0001>

<llo_original>
// kernel: tpu_custom_call.1
$region0: #{tpu_custom_call.1}
  #allocation0 [shape = 'u32[]', space=smem, size = 0x4, offset = 0x4, fixed_abs, tag = 'smem constant byte address 0x4 - core index']
  #allocation1 [shape = 'u32[144,128]{1,0:T(1,128)}', space=vmem, size = 0x12000, scoped, tag = 'internal scratch']
  %s0 = inlined_call_operand.hbm [shape: f32[16,32], index: 0, kind: input, shape index: {}]
  %s1 = inlined_call_operand.hbm [shape: f32[1,32], index: 1, kind: input, shape index: {}]
  %s2 = inlined_call_operand.hbm [shape: f32[1,32], index: 2, kind: input, shape index: {}]
  %s3 = inlined_call_operand.hbm [shape: f32[32,128], index: 3, kind: input, shape index: {}]
  %s4 = inlined_call_operand.hbm [shape: f32[1,128], index: 4, kind: input, shape index: {}]
  %s5 = inlined_call_operand.hbm [shape: f32[1,128], index: 5, kind: input, shape index: {}]
  %s6 = inlined_call_operand.hbm [shape: f32[128,256], index: 6, kind: input, shape index: {}]
  %s7 = inlined_call_operand.vmem [shape: f32[1,256], index: 7, kind: input, shape index: {}]
  %s8 = inlined_call_operand.vmem [shape: f32[1,256], index: 8, kind: input, shape index: {}]
  %s9 = inlined_call_operand.hbm [shape: f32[256,512], index: 9, kind: input, shape index: {}]
  %s10 = inlined_call_operand.vmem [shape: f32[1,512], index: 10, kind: input, shape index: {}]
  %s11 = inlined_call_operand.vmem [shape: f32[1,512], index: 11, kind: input, shape index: {}]
  %s12 = inlined_call_operand.hbm [shape: f32[256,512], index: 12, kind: input, shape index: {}]
  %s13 = inlined_call_operand.vmem [shape: f32[1,512], index: 13, kind: input, shape index: {}]
  %s14 = inlined_call_operand.vmem [shape: f32[1,512], index: 14, kind: input, shape index: {}]
  %s15 = inlined_call_operand.hbm [shape: f32[16,512], index: 15, kind: output, shape index: {0}]
  %s16 = inlined_call_operand.hbm [shape: f32[16,512], index: 16, kind: output, shape index: {1}]
  %17 = xla_tuple %s15, %s16
  %s18 = sld [smem:[#allocation0]]
  $region114: #{tpu_custom_call.1} parent=0
    _
  %s20 = ssub.s32 1, %s18
  %s21 = scalar_select 0, %s20, %s18
  $region1: #{tpu_custom_call.1} parent=0
    #allocation2 [shape = 'u8[8192]{0}', space=vmem, size = 0x2000, scoped, tag = 'input window, operand 0, single buffered']
    #allocation3 [shape = 's32[1]{0}', space=sflag, size = 0x4, scoped, tag = 'scoped memory for tpu_custom_call.1']
    #allocation4 [shape = 's32[1]{0}', space=sflag, size = 0x4, scoped, tag = 'scoped memory for tpu_custom_call.1']
    #allocation5 [shape = 'u8[512]{0}', space=vmem, size = 0x400, scoped, tag = 'input window, operand 1, single buffered']
    #allocation6 [shape = 's32[1]{0}', space=sflag, size = 0x4, scoped, tag = 'scoped memory for tpu_custom_call.1']
    #allocation7 [shape = 'u8[512]{0}', space=vmem, size = 0x400, scoped, tag = 'input window, operand 2, single buffered']
    #allocation8 [shape = 'u8[16384]{0}', space=vmem, size = 0x4000, scoped, tag = 'input window, operand 3, single buffered']
    #allocation9 [shape = 's32[1]{0}', space=sflag, size = 0x4, scoped, tag = 'scoped memory for tpu_custom_call.1']
    #allocation10 [shape = 'u8[512]{0}', space=vmem, size = 0x400, scoped, tag = 'input window, operand 4, single buffered']
    #allocation11 [shape = 'u8[512]{0}', space=vmem, size = 0x400, scoped, tag = 'input window, operand 5, single buffered']
    #allocation12 [shape = 's32[1]{0}', space=sflag, size = 0x4, scoped, tag = 'scoped memory for tpu_custom_call.1']
    #allocation13 [shape = 'u8[131072]{0}', space=vmem, size = 0x20000, scoped, tag = 'input window, operand 6, single buffered']
    #allocation14 [shape = 'u8[524288]{0}', space=vmem, size = 0x80000, scoped, tag = 'input window, operand 9, single buffered']
    #allocation15 [shape = 's32[1]{0}', space=sflag, size = 0x4, scoped, tag = 'scoped memory for tpu_custom_call.1']
    #allocation16 [shape = 'u8[524288]{0}', space=vmem, size = 0x80000, scoped, tag = 'input window, operand 12, single buffered']
    #allocation17 [shape = 'u8[32768]{0}', space=vmem, size = 0x8000, scoped, tag = 'output window, operand 0, single buffered']
    #allocation18 [shape = 'u8[32768]{0}', space=vmem, size = 0x8000, scoped, tag = 'output window, operand 1, single buffered']
    #allocation19 [shape = 's32[1]{0}', space=sflag, size = 0x4, scoped, tag = 'scoped memory for tpu_custom_call.1']
    %22 = vsyncpa [#allocation3], 0
    %23 = vsyncpa [#allocation6], 0
    %24 = vsyncpa [#allocation9], 0
    %25 = vsyncpa [#allocation12], 0
    %26 = vsyncpa [#allocation15], 0
    %27 = vsyncpa [#allocation4], 0
    %28 = vsyncpa [#allocation19], 0
    // Predicated region
    $region2: #{tpu_custom_call.1} parent=1 // pred_check
      _
    $region3: #{tpu_custom_call.1} parent=1 // pred_check_branch
      %30 = sbr.rel (0) target = $region5
    $region4: #{tpu_custom_call.1} parent=1 // pred_region
      %s32 = ssub.s32 256, 256
      %33 = vsyncadd [#allocation3], %s32
      %s34 = sshll.u32 [#allocation2], 4
      %s35 = int_to_ptr.vmem [resolvable:$true] %s34
      %40 = dma.hbm_to_vmem [thread:$0]  %s0, 256, %s35, [#allocation3], 128, 128, 8
    $region5: #{tpu_custom_call.1} parent=1 // pred_fallthru
      _
    // Predicated region
    $region6: #{tpu_custom_call.1} parent=1 // pred_check
      _
    $region7: #{tpu_custom_call.1} parent=1 // pred_check_branch
      %42 = sbr.rel (0) target = $region9
    $region8: #{tpu_custom_call.1} parent=1 // pred_region
      %s44 = ssub.s32 16, 16
      %45 = vsyncadd [#allocation6], %s44
      %s47 = sshll.u32 [#allocation5], 4
      %s48 = int_to_ptr.vmem [resolvable:$true] %s47
      %50 = dma.hbm_to_vmem [thread:$0]  %s1, 16, %s48, [#allocation6]
    $region9: #{tpu_custom_call.1} parent=1 // pred_fallthru
      _
    // Predicated region
    $region10: #{tpu_custom_call.1} parent=1 // pred_check
      _
    $region11: #{tpu_custom_call.1} parent=1 // pred_check_branch
      %52 = sbr.rel (0) target = $region13
    $region12: #{tpu_custom_call.1} parent=1 // pred_region
      %s54 = ssub.s32 16, 16
      %55 = vsyncadd [#allocation6], %s54
      %s57 = sshll.u32 [#allocation7], 4
      %s58 = int_to_ptr.vmem [resolvable:$true] %s57
      %60 = dma.hbm_to_vmem [thread:$0]  %s2, 16, %s58, [#allocation6]
    $region13: #{tpu_custom_call.1} parent=1 // pred_fallthru
      _
    // Predicated region
    $region14: #{tpu_custom_call.1} parent=1 // pred_check
      _
    $region15: #{tpu_custom_call.1} parent=1 // pred_check_branch
      %62 = sbr.rel (0) target = $region17
    $region16: #{tpu_custom_call.1} parent=1 // pred_region
      %s64 = ssub.s32 512, 512
      %65 = vsyncadd [#allocation9], %s64
      %s66 = sshll.u32 [#allocation8], 4
      %s67 = int_to_ptr.vmem [resolvable:$true] %s66
      %72 = dma.hbm_to_vmem [thread:$0]  %s3, 512, %s67, [#allocation9], 128, 128, 8
    $region17: #{tpu_custom_call.1} parent=1 // pred_fallthru
      _
    // Predicated region
    $region18: #{tpu_custom_call.1} parent=1 // pred_check
      _
    $region19: #{tpu_custom_call.1} parent=1 // pred_check_branch
      %74 = sbr.rel (0) target = $region21
    $region20: #{tpu_custom_call.1} parent=1 // pred_region
      %s76 = ssub.s32 16, 16
      %77 = vsyncadd [#allocation9], %s76
      %s79 = sshll.u32 [#allocation10], 4
      %s80 = int_to_ptr.vmem [resolvable:$true] %s79
      %82 = dma.hbm_to_vmem [thread:$0]  %s4, 16, %s80, [#allocation9]
    $region21: #{tpu_custom_call.1} parent=1 // pred_fallthru
      _
    // Predicated region
    $region22: #{tpu_custom_call.1} parent=1 // pred_check
      _
    $region23: #{tpu_custom_call.1} parent=1 // pred_check_branch
      %84 = sbr.rel (0) target = $region25
    $region24: #{tpu_custom_call.1} parent=1 // pred_region
      %s86 = ssub.s32 16, 16
      %87 = vsyncadd [#allocation12], %s86
      %s89 = sshll.u32 [#allocation11], 4
      %s90 = int_to_ptr.vmem [resolvable:$true] %s89
      %92 = dma.hbm_to_vmem [thread:$0]  %s5, 16, %s90, [#allocation12]
    $region25: #{tpu_custom_call.1} parent=1 // pred_fallthru
      _
    // Predicated region
    $region26: #{tpu_custom_call.1} parent=1 // pred_check
      _
    $region27: #{tpu_custom_call.1} parent=1 // pred_check_branch
      %94 = sbr.rel (0) target = $region29
    $region28: #{tpu_custom_call.1} parent=1 // pred_region
      %s96 = ssub.s32 4096, 4096
      %97 = vsyncadd [#allocation12], %s96
      %s98 = sshll.u32 [#allocation13], 4
      %s99 = int_to_ptr.vmem [resolvable:$true] %s98
      %104 = dma.hbm_to_vmem [thread:$0]  %s6, 4096, %s99, [#allocation12], 256, 256, 16
    $region29: #{tpu_custom_call.1} parent=1 // pred_fallthru
      _
    // Predicated region
    $region30: #{tpu_custom_call.1} parent=1 // pred_check
      _
    $region31: #{tpu_custom_call.1} parent=1 // pred_check_branch
      %106 = sbr.rel (0) target = $region33
    $region32: #{tpu_custom_call.1} parent=1 // pred_region
      _
    $region33: #{tpu_custom_call.1} parent=1 // pred_fallthru
      _
    // Predicated region
    $region34: #{tpu_custom_call.1} parent=1 // pred_check
      _
    $region35: #{tpu_custom_call.1} parent=1 // pred_check_branch
      %108 = sbr.rel (0) target = $region37
    $region36: #{tpu_custom_call.1} parent=1 // pred_region
      _
    $region37: #{tpu_custom_call.1} parent=1 // pred_fallthru
      _
    // Predicated region
    $region38: #{tpu_custom_call.1} parent=1 // pred_check
      _
    $region39: #{tpu_custom_call.1} parent=1 // pred_check_branch
      %110 = sbr.rel (0) target = $region41
    $region40: #{tpu_custom_call.1} parent=1 // pred_region
      %s112 = ssub.s32 16384, 16384
      %113 = vsyncadd [#allocation15], %s112
      %s114 = sshll.u32 [#allocation14], 4
      %s115 = int_to_ptr.vmem [resolvable:$true] %s114
      %120 = dma.hbm_to_vmem [thread:$0]  %s9, 16384, %s115, [#allocation15], 512, 512, 32
    $region41: #{tpu_custom_call.1} parent=1 // pred_fallthru
      _
    // Predicated region
    $region42: #{tpu_custom_call.1} parent=1 // pred_check
      _
    $region43: #{tpu_custom_call.1} parent=1 // pred_check_branch
      %122 = sbr.rel (0) target = $region45
    $region44: #{tpu_custom_call.1} parent=1 // pred_region
      _
    $region45: #{tpu_custom_call.1} parent=1 // pred_fallthru
      _
    // Predicated region
    $region46: #{tpu_custom_call.1} parent=1 // pred_check
      _
    $region47: #{tpu_custom_call.1} parent=1 // pred_check_branch
      %124 = sbr.rel (0) target = $region49
    $region48: #{tpu_custom_call.1} parent=1 // pred_region
      _
    $region49: #{tpu_custom_call.1} parent=1 // pred_fallthru
      _
    // Predicated region
    $region50: #{tpu_custom_call.1} parent=1 // pred_check
      _
    $region51: #{tpu_custom_call.1} parent=1 // pred_check_branch
      %126 = sbr.rel (0) target = $region53
    $region52: #{tpu_custom_call.1} parent=1 // pred_region
      %s128 = ssub.s32 16384, 16384
      %129 = vsyncadd [#allocation15], %s128
      %s130 = sshll.u32 [#allocation16], 4
      %s131 = int_to_ptr.vmem [resolvable:$true] %s130
      %136 = dma.hbm_to_vmem [thread:$0]  %s12, 16384, %s131, [#allocation15], 512, 512, 32
    $region53: #{tpu_custom_call.1} parent=1 // pred_fallthru
      _
    // Predicated region
    $region54: #{tpu_custom_call.1} parent=1 // pred_check
      _
    $region55: #{tpu_custom_call.1} parent=1 // pred_check_branch
      %138 = sbr.rel (0) target = $region57
    $region56: #{tpu_custom_call.1} parent=1 // pred_region
      _
    $region57: #{tpu_custom_call.1} parent=1 // pred_fallthru
      _
    // Predicated region
    $region58: #{tpu_custom_call.1} parent=1 // pred_check
      _
    $region59: #{tpu_custom_call.1} parent=1 // pred_check_branch
      %140 = sbr.rel (0) target = $region61
    $region60: #{tpu_custom_call.1} parent=1 // pred_region
      _
    $region61: #{tpu_custom_call.1} parent=1 // pred_fallthru
      _
    // Predicated region
    $region62: #{tpu_custom_call.1} parent=1 // pred_check
      _
    $region63: #{tpu_custom_call.1} parent=1 // pred_check_branch
      %142 = sbr.rel (0) target = $region65
    $region64: #{tpu_custom_call.1} parent=1 // pred_region
      %143 = dma.done [#allocation3], 256
    $region65: #{tpu_custom_call.1} parent=1 // pred_fallthru
      _
    // Predicated region
    $region66: #{tpu_custom_call.1} parent=1 // pred_check
      _
    $region67: #{tpu_custom_call.1} parent=1 // pred_check_branch
      %145 = sbr.rel (0) target = $region69
    $region68: #{tpu_custom_call.1} parent=1 // pred_region
      %146 = dma.done [#allocation6], 16
    $region69: #{tpu_custom_call.1} parent=1 // pred_fallthru
      _
    // Predicated region
    $region70: #{tpu_custom_call.1} parent=1 // pred_check
      _
    $region71: #{tpu_custom_call.1} parent=1 // pred_check_branch
      %148 = sbr.rel (0) target = $region73
    $region72: #{tpu_custom_call.1} parent=1 // pred_region
      %149 = dma.done [#allocation6], 16
    $region73: #{tpu_custom_call.1} parent=1 // pred_fallthru
      _
    // Predicated region
    $region74: #{tpu_custom_call.1} parent=1 // pred_check
      _
    $region75: #{tpu_custom_call.1} parent=1 // pred_check_branch
      %151 = sbr.rel (0) target = $region77
    $region76: #{tpu_custom_call.1} parent=1 // pred_region
      %152 = dma.done [#allocation9], 512
    $region77: #{tpu_custom_call.1} parent=1 // pred_fallthru
      _
    // Predicated region
    $region78: #{tpu_custom_call.1} parent=1 // pred_check
      _
    $region79: #{tpu_custom_call.1} parent=1 // pred_check_branch
      %154 = sbr.rel (0) target = $region81
    $region80: #{tpu_custom_call.1} parent=1 // pred_region
      %155 = dma.done [#allocation9], 16
    $region81: #{tpu_custom_call.1} parent=1 // pred_fallthru
      _
    // Predicated region
    $region82: #{tpu_custom_call.1} parent=1 // pred_check
      _
    $region83: #{tpu_custom_call.1} parent=1 // pred_check_branch
      %157 = sbr.rel (0) target = $region85
    $region84: #{tpu_custom_call.1} parent=1 // pred_region
      %158 = dma.done [#allocation12], 16
    $region85: #{tpu_custom_call.1} parent=1 // pred_fallthru
      _
    // Predicated region
    $region86: #{tpu_custom_call.1} parent=1 // pred_check
      _
    $region87: #{tpu_custom_call.1} parent=1 // pred_check_branch
      %160 = sbr.rel (0) target = $region89
    $region88: #{tpu_custom_call.1} parent=1 // pred_region
      %161 = dma.done [#allocation12], 4096
    $region89: #{tpu_custom_call.1} parent=1 // pred_fallthru
      _
    // Predicated region
    $region90: #{tpu_custom_call.1} parent=1 // pred_check
      _
    $region91: #{tpu_custom_call.1} parent=1 // pred_check_branch
      %163 = sbr.rel (0) target = $region93
    $region92: #{tpu_custom_call.1} parent=1 // pred_region
      %164 = dma.done [#allocation15], 16384
    $region93: #{tpu_custom_call.1} parent=1 // pred_fallthru
      _
    // Predicated region
    $region94: #{tpu_custom_call.1} parent=1 // pred_check
      _
    $region95: #{tpu_custom_call.1} parent=1 // pred_check_branch
      %166 = sbr.rel (0) target = $region97
    $region96: #{tpu_custom_call.1} parent=1 // pred_region
      %167 = dma.done [#allocation15], 16384
    $region97: #{tpu_custom_call.1} parent=1 // pred_fallthru
      _
    %v168 = vld [vmem:[#allocation2] sm:$0xff]
    %v169 = vld [vmem:[#allocation2 + $0x8] sm:$0xff]
    %v170 = vld [vmem:[#allocation5] sm:$0x1]
    %v172 = vlaneseq
    %v173 = vshrl.u32 %v172, 7
    %v174 = vsub.s32 0, %v173
    %v175 = vrot.slane %v170, %v174
    %v177 = vmul.f32 %v168, %v175
    %v178 = vmul.f32 %v169, %v175
    %v179 = vld [vmem:[#allocation7] sm:$0x1]
    %v181 = vlaneseq
    %v182 = vshrl.u32 %v181, 7
    %v183 = vsub.s32 0, %v182
    %v184 = vrot.slane %v179, %v183
    %v186 = vadd.f32 %v177, %v184
    %v187 = vadd.f32 %v178, %v184
    %v188 = vld [vmem:[#allocation8] sm:$0xff]
    %v189 = vld [vmem:[#allocation8 + $0x8] sm:$0xff]
    %v190 = vld [vmem:[#allocation8 + $0x10] sm:$0xff]
    %v191 = vld [vmem:[#allocation8 + $0x18] sm:$0xff]
    %v192 = vld [vmem:[#allocation10] sm:$0x1]
    %v193 = vld [vmem:[#allocation11] sm:$0x1]
    %vm194 = vcmask 261120
    %v196 = vsel %vm194, %v186, 0
    %v199 = vsel %vm194, %v187, 0
    %201 = vmatprep.subr.mxu0 0.0
    %202 = vmatpush1.msra.mxu0 %v188
    %203 = vmatprep.subr.mxu0 0.0
    %204 = vmatpush1.msra.mxu0 %v189
    %205 = vmatprep.subr.mxu0 0.0
    %206 = vmatpush1.msra.mxu0 %v190
    %207 = vmatprep.subr.mxu0 0.0
    %208 = vmatpush1.msra.mxu0 %v191
    %209 = vmatprep.subr.mxu0 0.0
    %210 = vmatpush1.msra.mxu0 0.0
    %211 = vmatprep.subr.mxu0 0.0
    %212 = vmatpush1.msra.mxu0 0.0
    %213 = vmatprep.subr.mxu0 0.0
    %214 = vmatpush1.msra.mxu0 0.0
    %215 = vmatprep.subr.mxu0 0.0
    %216 = vmatpush1.msra.mxu0 0.0
    %217 = vmatprep.subr.mxu0 0.0
    %218 = vmatpush1.msra.mxu0 0.0
    %219 = vmatprep.subr.mxu0 0.0
    %220 = vmatpush1.msra.mxu0 0.0
    %221 = vmatprep.subr.mxu0 0.0
    %222 = vmatpush1.msra.mxu0 0.0
    %223 = vmatprep.subr.mxu0 0.0
    %224 = vmatpush1.msra.mxu0 0.0
    %225 = vmatprep.subr.mxu0 0.0
    %226 = vmatpush1.msra.mxu0 0.0
    %227 = vmatprep.subr.mxu0 0.0
    %228 = vmatpush1.msra.mxu0 0.0
    %229 = vmatprep.subr.mxu0 0.0
    %230 = vmatpush1.msra.mxu0 0.0
    %231 = vmatprep.subr.mxu0 0.0
    %232 = vmatpush1.msra.mxu0 0.0
    %233 = vmatprep.subr.mxu0 0.0
    %234 = vmatpush1.msra.mxu0 0.0
    %235 = vmatprep.subr.mxu0 0.0
    %236 = vmatpush1.msra.mxu0 0.0
    %237 = vmatprep.subr.mxu0 0.0
    %238 = vmatpush1.msra.mxu0 0.0
    %239 = vmatprep.subr.mxu0 0.0
    %240 = vmatpush1.msra.mxu0 0.0
    %241 = vmatprep.subr.mxu0 0.0
    %242 = vmatpush1.msra.mxu0 0.0
    %243 = vmatprep.subr.mxu0 0.0
    %244 = vmatpush1.msra.mxu0 0.0
    %245 = vmatprep.subr.mxu0 0.0
    %246 = vmatpush1.msra.mxu0 0.0
    %247 = vmatprep.subr.mxu0 0.0
    %248 = vmatpush1.msra.mxu0 0.0
    %249 = vmatprep.subr.mxu0 0.0
    %250 = vmatpush1.msra.mxu0 0.0
    %251 = vmatprep.subr.mxu0 0.0
    %252 = vmatpush1.msra.mxu0 0.0
    %253 = vmatprep.subr.mxu0 0.0
    %254 = vmatpush1.msra.mxu0 0.0
    %255 = vmatprep.subr.mxu0 0.0
    %256 = vmatpush1.msra.mxu0 0.0
    %257 = vmatprep.subr.mxu0 0.0
    %258 = vmatpush1.msra.mxu0 0.0
    %259 = vmatprep.subr.mxu0 0.0
    %260 = vmatpush1.msra.mxu0 0.0
    %261 = vmatprep.subr.mxu0 0.0
    %262 = vmatpush1.msra.mxu0 0.0
    %263 = vmatprep.subr.mxu0 0.0
    %264 = vmatpush1.msra.mxu0 0.0
    %265 = vmatprep.mubr.f32.mxu0 0.0
    %266 = vmatmul.mubr.f32.gmra.mrb[0].mxu0 %v196
    %v267 = vpop.f32.mrb[0].mxu0
    %v268 = vadd.f32 0.0, %v267
    %v269 = vpop.f32.mrb[0].mxu0
    %270 = vmatprep.mubr.f32.mxu0 0.0
    %271 = vmatmul.mubr.f32.gmra.mrb[0].mxu0 %v199
    %v272 = vpop.f32.mrb[0].mxu0
    %v273 = vadd.f32 0.0, %v272
    %v274 = vpop.f32.mrb[0].mxu0
    %275 = vdwg.mxu0
    %v277 = vlaneseq
    %v278 = vshrl.u32 %v277, 7
    %v279 = vsub.s32 0, %v278
    %v280 = vrot.slane %v192, %v279
    %v282 = vmul.f32 %v268, %v280
    %v283 = vmul.f32 %v273, %v280
    %v285 = vlaneseq
    %v286 = vshrl.u32 %v285, 7
    %v287 = vsub.s32 0, %v286
    %v288 = vrot.slane %v193, %v287
    %v290 = vadd.f32 %v282, %v288
    %v291 = vadd.f32 %v283, %v288
    %v292 = vmax.f32 %v290, 0.0
    %v293 = vmax.f32 %v291, 0.0
    %v294 = vld [vmem:[#allocation13] sm:$0xff]
    %v295 = vld [vmem:[#allocation13 + $0x8] sm:$0xff]
    %v296 = vld [vmem:[#allocation13 + $0x10] sm:$0xff]
    %v297 = vld [vmem:[#allocation13 + $0x18] sm:$0xff]
    %v298 = vld [vmem:[#allocation13 + $0x20] sm:$0xff]
    %v299 = vld [vmem:[#allocation13 + $0x28] sm:$0xff]
    %v300 = vld [vmem:[#allocation13 + $0x30] sm:$0xff]
    %v301 = vld [vmem:[#allocation13 + $0x38] sm:$0xff]
    %v302 = vld [vmem:[#allocation13 + $0x40] sm:$0xff]
    %v303 = vld [vmem:[#allocation13 + $0x48] sm:$0xff]
    %v304 = vld [vmem:[#allocation13 + $0x50] sm:$0xff]
    %v305 = vld [vmem:[#allocation13 + $0x58] sm:$0xff]
    %v306 = vld [vmem:[#allocation13 + $0x60] sm:$0xff]
    %v307 = vld [vmem:[#allocation13 + $0x68] sm:$0xff]
    %v308 = vld [vmem:[#allocation13 + $0x70] sm:$0xff]
    %v309 = vld [vmem:[#allocation13 + $0x78] sm:$0xff]
    %v310 = vld [vmem:[#allocation13 + $0x80] sm:$0xff]
    %v311 = vld [vmem:[#allocation13 + $0x88] sm:$0xff]
    %v312 = vld [vmem:[#allocation13 + $0x90] sm:$0xff]
    %v313 = vld [vmem:[#allocation13 + $0x98] sm:$0xff]
    %v314 = vld [vmem:[#allocation13 + $0xa0] sm:$0xff]
    %v315 = vld [vmem:[#allocation13 + $0xa8] sm:$0xff]
    %v316 = vld [vmem:[#allocation13 + $0xb0] sm:$0xff]
    %v317 = vld [vmem:[#allocation13 + $0xb8] sm:$0xff]
    %v318 = vld [vmem:[#allocation13 + $0xc0] sm:$0xff]
    %v319 = vld [vmem:[#allocation13 + $0xc8] sm:$0xff]
    %v320 = vld [vmem:[#allocation13 + $0xd0] sm:$0xff]
    %v321 = vld [vmem:[#allocation13 + $0xd8] sm:$0xff]
    %v322 = vld [vmem:[#allocation13 + $0xe0] sm:$0xff]
    %v323 = vld [vmem:[#allocation13 + $0xe8] sm:$0xff]
    %v324 = vld [vmem:[#allocation13 + $0xf0] sm:$0xff]
    %v325 = vld [vmem:[#allocation13 + $0xf8] sm:$0xff]
    %v326 = vld [vmem:[%s7] sm:$0x3]
    %v327 = vld [vmem:[%s8] sm:$0x3]
    %328 = vmatprep.subr.mxu0 %v295
    %329 = vmatpush1.msra.mxu0 %v294
    %330 = vmatprep.subr.mxu0 %v297
    %331 = vmatpush1.msra.mxu0 %v296
    %332 = vmatprep.subr.mxu0 %v299
    %333 = vmatpush1.msra.mxu0 %v298
    %334 = vmatprep.subr.mxu0 %v301
    %335 = vmatpush1.msra.mxu0 %v300
    %336 = vmatprep.subr.mxu0 %v303
    %337 = vmatpush1.msra.mxu0 %v302
    %338 = vmatprep.subr.mxu0 %v305
    %339 = vmatpush1.msra.mxu0 %v304
    %340 = vmatprep.subr.mxu0 %v307
    %341 = vmatpush1.msra.mxu0 %v306
    %342 = vmatprep.subr.mxu0 %v309
    %343 = vmatpush1.msra.mxu0 %v308
    %344 = vmatprep.subr.mxu0 %v311
    %345 = vmatpush1.msra.mxu0 %v310
    %346 = vmatprep.subr.mxu0 %v313
    %347 = vmatpush1.msra.mxu0 %v312
    %348 = vmatprep.subr.mxu0 %v315
    %349 = vmatpush1.msra.mxu0 %v314
    %350 = vmatprep.subr.mxu0 %v317
    %351 = vmatpush1.msra.mxu0 %v316
    %352 = vmatprep.subr.mxu0 %v319
    %353 = vmatpush1.msra.mxu0 %v318
    %354 = vmatprep.subr.mxu0 %v321
    %355 = vmatpush1.msra.mxu0 %v320
    %356 = vmatprep.subr.mxu0 %v323
    %357 = vmatpush1.msra.mxu0 %v322
    %358 = vmatprep.subr.mxu0 %v325
    %359 = vmatpush1.msra.mxu0 %v324
    %360 = vmatprep.subr.mxu0 0.0
    %361 = vmatpush1.msra.mxu0 0.0
    %362 = vmatprep.subr.mxu0 0.0
    %363 = vmatpush1.msra.mxu0 0.0
    %364 = vmatprep.subr.mxu0 0.0
    %365 = vmatpush1.msra.mxu0 0.0
    %366 = vmatprep.subr.mxu0 0.0
    %367 = vmatpush1.msra.mxu0 0.0
    %368 = vmatprep.subr.mxu0 0.0
    %369 = vmatpush1.msra.mxu0 0.0
    %370 = vmatprep.subr.mxu0 0.0
    %371 = vmatpush1.msra.mxu0 0.0
    %372 = vmatprep.subr.mxu0 0.0
    %373 = vmatpush1.msra.mxu0 0.0
    %374 = vmatprep.subr.mxu0 0.0
    %375 = vmatpush1.msra.mxu0 0.0
    %376 = vmatprep.subr.mxu0 0.0
    %377 = vmatpush1.msra.mxu0 0.0
    %378 = vmatprep.subr.mxu0 0.0
    %379 = vmatpush1.msra.mxu0 0.0
    %380 = vmatprep.subr.mxu0 0.0
    %381 = vmatpush1.msra.mxu0 0.0
    %382 = vmatprep.subr.mxu0 0.0
    %383 = vmatpush1.msra.mxu0 0.0
    %384 = vmatprep.subr.mxu0 0.0
    %385 = vmatpush1.msra.mxu0 0.0
    %386 = vmatprep.subr.mxu0 0.0
    %387 = vmatpush1.msra.mxu0 0.0
    %388 = vmatprep.subr.mxu0 0.0
    %389 = vmatpush1.msra.mxu0 0.0
    %390 = vmatprep.subr.mxu0 0.0
    %391 = vmatpush1.msra.mxu0 0.0
    %392 = vmatprep.mubr.f32.mxu0 0.0
    %393 = vmatmul.mubr.f32.gmra.mrb[0].mxu0 %v292
    %v394 = vpop.f32.mrb[0].mxu0
    %v395 = vadd.f32 0.0, %v394
    %v396 = vpop.f32.mrb[0].mxu0
    %v397 = vadd.f32 0.0, %v396
    %398 = vmatprep.mubr.f32.mxu0 0.0
    %399 = vmatmul.mubr.f32.gmra.mrb[0].mxu0 %v293
    %v400 = vpop.f32.mrb[0].mxu0
    %v401 = vadd.f32 0.0, %v400
    %v402 = vpop.f32.mrb[0].mxu0
    %v403 = vadd.f32 0.0, %v402
    %404 = vdwg.mxu0
    %v406 = vlaneseq
    %v407 = vshrl.u32 %v406, 7
    %v408 = vsub.s32 0, %v407
    %v409 = vrot.slane %v326, %v408
    %v410 = vlaneseq
    %v411 = vshrl.u32 %v410, 7
    %v412 = vsub.s32 1, %v411
    %v413 = vrot.slane %v326, %v412
    %v416 = vmul.f32 %v395, %v409
    %v417 = vmul.f32 %v397, %v413
    %v418 = vmul.f32 %v401, %v409
    %v419 = vmul.f32 %v403, %v413
    %v421 = vlaneseq
    %v422 = vshrl.u32 %v421, 7
    %v423 = vsub.s32 0, %v422
    %v424 = vrot.slane %v327, %v423
    %v425 = vlaneseq
    %v426 = vshrl.u32 %v425, 7
    %v427 = vsub.s32 1, %v426
    %v428 = vrot.slane %v327, %v427
    %v431 = vadd.f32 %v416, %v424
    %v432 = vadd.f32 %v417, %v428
    %v433 = vadd.f32 %v418, %v424
    %v434 = vadd.f32 %v419, %v428
    %v435 = vmax.f32 %v431, 0.0
    %v436 = vmax.f32 %v432, 0.0
    %v437 = vmax.f32 %v433, 0.0
    %v438 = vmax.f32 %v434, 0.0
    %v439 = vld [vmem:[#allocation14] sm:$0xff]
    %v440 = vld [vmem:[#allocation14 + $0x8] sm:$0xff]
    %v441 = vld [vmem:[#allocation14 + $0x10] sm:$0xff]
    %v442 = vld [vmem:[#allocation14 + $0x18] sm:$0xff]
    %v443 = vld [vmem:[#allocation14 + $0x20] sm:$0xff]
    %v444 = vld [vmem:[#allocation14 + $0x28] sm:$0xff]
    %v445 = vld [vmem:[#allocation14 + $0x30] sm:$0xff]
    %v446 = vld [vmem:[#allocation14 + $0x38] sm:$0xff]
    %v447 = vld [vmem:[#allocation14 + $0x40] sm:$0xff]
    %v448 = vld [vmem:[#allocation14 + $0x48] sm:$0xff]
    %v449 = vld [vmem:[#allocation14 + $0x50] sm:$0xff]
    %v450 = vld [vmem:[#allocation14 + $0x58] sm:$0xff]
    %v451 = vld [vmem:[#allocation14 + $0x60] sm:$0xff]
    %v452 = vld [vmem:[#allocation14 + $0x68] sm:$0xff]
    %v453 = vld [vmem:[#allocation14 + $0x70] sm:$0xff]
    %v454 = vld [vmem:[#allocation14 + $0x78] sm:$0xff]
    %v455 = vld [vmem:[#allocation14 + $0x80] sm:$0xff]
    %v456 = vld [vmem:[#allocation14 + $0x88] sm:$0xff]
    %v457 = vld [vmem:[#allocation14 + $0x90] sm:$0xff]
    %v458 = vld [vmem:[#allocation14 + $0x98] sm:$0xff]
    %v459 = vld [vmem:[#allocation14 + $0xa0] sm:$0xff]
    %v460 = vld [vmem:[#allocation14 + $0xa8] sm:$0xff]
    %v461 = vld [vmem:[#allocation14 + $0xb0] sm:$0xff]
    %v462 = vld [vmem:[#allocation14 + $0xb8] sm:$0xff]
    %v463 = vld [vmem:[#allocation14 + $0xc0] sm:$0xff]
    %v464 = vld [vmem:[#allocation14 + $0xc8] sm:$0xff]
    %v465 = vld [vmem:[#allocation14 + $0xd0] sm:$0xff]
    %v466 = vld [vmem:[#allocation14 + $0xd8] sm:$0xff]
    %v467 = vld [vmem:[#allocation14 + $0xe0] sm:$0xff]
    %v468 = vld [vmem:[#allocation14 + $0xe8] sm:$0xff]
    %v469 = vld [vmem:[#allocation14 + $0xf0] sm:$0xff]
    %v470 = vld [vmem:[#allocation14 + $0xf8] sm:$0xff]
    %v471 = vld [vmem:[#allocation14 + $0x100] sm:$0xff]
    %v472 = vld [vmem:[#allocation14 + $0x108] sm:$0xff]
    %v473 = vld [vmem:[#allocation14 + $0x110] sm:$0xff]
    %v474 = vld [vmem:[#allocation14 + $0x118] sm:$0xff]
    %v475 = vld [vmem:[#allocation14 + $0x120] sm:$0xff]
    %v476 = vld [vmem:[#allocation14 + $0x128] sm:$0xff]
    %v477 = vld [vmem:[#allocation14 + $0x130] sm:$0xff]
    %v478 = vld [vmem:[#allocation14 + $0x138] sm:$0xff]
    %v479 = vld [vmem:[#allocation14 + $0x140] sm:$0xff]
    %v480 = vld [vmem:[#allocation14 + $0x148] sm:$0xff]
    %v481 = vld [vmem:[#allocation14 + $0x150] sm:$0xff]
    %v482 = vld [vmem:[#allocation14 + $0x158] sm:$0xff]
    %v483 = vld [vmem:[#allocation14 + $0x160] sm:$0xff]
    %v484 = vld [vmem:[#allocation14 + $0x168] sm:$0xff]
    %v485 = vld [vmem:[#allocation14 + $0x170] sm:$0xff]
    %v486 = vld [vmem:[#allocation14 + $0x178] sm:$0xff]
    %v487 = vld [vmem:[#allocation14 + $0x180] sm:$0xff]
    %v488 = vld [vmem:[#allocation14 + $0x188] sm:$0xff]
    %v489 = vld [vmem:[#allocation14 + $0x190] sm:$0xff]
    %v490 = vld [vmem:[#allocation14 + $0x198] sm:$0xff]
    %v491 = vld [vmem:[#allocation14 + $0x1a0] sm:$0xff]
    %v492 = vld [vmem:[#allocation14 + $0x1a8] sm:$0xff]
    %v493 = vld [vmem:[#allocation14 + $0x1b0] sm:$0xff]
    %v494 = vld [vmem:[#allocation14 + $0x1b8] sm:$0xff]
    %v495 = vld [vmem:[#allocation14 + $0x1c0] sm:$0xff]
    %v496 = vld [vmem:[#allocation14 + $0x1c8] sm:$0xff]
    %v497 = vld [vmem:[#allocation14 + $0x1d0] sm:$0xff]
    %v498 = vld [vmem:[#allocation14 + $0x1d8] sm:$0xff]
    %v499 = vld [vmem:[#allocation14 + $0x1e0] sm:$0xff]
    %v500 = vld [vmem:[#allocation14 + $0x1e8] sm:$0xff]
    %v501 = vld [vmem:[#allocation14 + $0x1f0] sm:$0xff]
    %v502 = vld [vmem:[#allocation14 + $0x1f8] sm:$0xff]
    %v503 = vld [vmem:[#allocation14 + $0x200] sm:$0xff]
    %v504 = vld [vmem:[#allocation14 + $0x208] sm:$0xff]
    %v505 = vld [vmem:[#allocation14 + $0x210] sm:$0xff]
    %v506 = vld [vmem:[#allocation14 + $0x218] sm:$0xff]
    %v507 = vld [vmem:[#allocation14 + $0x220] sm:$0xff]
    %v508 = vld [vmem:[#allocation14 + $0x228] sm:$0xff]
    %v509 = vld [vmem:[#allocation14 + $0x230] sm:$0xff]
    %v510 = vld [vmem:[#allocation14 + $0x238] sm:$0xff]
    %v511 = vld [vmem:[#allocation14 + $0x240] sm:$0xff]
    %v512 = vld [vmem:[#allocation14 + $0x248] sm:$0xff]
    %v513 = vld [vmem:[#allocation14 + $0x250] sm:$0xff]
    %v514 = vld [vmem:[#allocation14 + $0x258] sm:$0xff]
    %v515 = vld [vmem:[#allocation14 + $0x260] sm:$0xff]
    %v516 = vld [vmem:[#allocation14 + $0x268] sm:$0xff]
    %v517 = vld [vmem:[#allocation14 + $0x270] sm:$0xff]
    %v518 = vld [vmem:[#allocation14 + $0x278] sm:$0xff]
    %v519 = vld [vmem:[#allocation14 + $0x280] sm:$0xff]
    %v520 = vld [vmem:[#allocation14 + $0x288] sm:$0xff]
    %v521 = vld [vmem:[#allocation14 + $0x290] sm:$0xff]
    %v522 = vld [vmem:[#allocation14 + $0x298] sm:$0xff]
    %v523 = vld [vmem:[#allocation14 + $0x2a0] sm:$0xff]
    %v524 = vld [vmem:[#allocation14 + $0x2a8] sm:$0xff]
    %v525 = vld [vmem:[#allocation14 + $0x2b0] sm:$0xff]
    %v526 = vld [vmem:[#allocation14 + $0x2b8] sm:$0xff]
    %v527 = vld [vmem:[#allocation14 + $0x2c0] sm:$0xff]
    %v528 = vld [vmem:[#allocation14 + $0x2c8] sm:$0xff]
    %v529 = vld [vmem:[#allocation14 + $0x2d0] sm:$0xff]
    %v530 = vld [vmem:[#allocation14 + $0x2d8] sm:$0xff]
    %v531 = vld [vmem:[#allocation14 + $0x2e0] sm:$0xff]
    %v532 = vld [vmem:[#allocation14 + $0x2e8] sm:$0xff]
    %v533 = vld [vmem:[#allocation14 + $0x2f0] sm:$0xff]
    %v534 = vld [vmem:[#allocation14 + $0x2f8] sm:$0xff]
    %v535 = vld [vmem:[#allocation14 + $0x300] sm:$0xff]
    %v536 = vld [vmem:[#allocation14 + $0x308] sm:$0xff]
    %v537 = vld [vmem:[#allocation14 + $0x310] sm:$0xff]
    %v538 = vld [vmem:[#allocation14 + $0x318] sm:$0xff]
    %v539 = vld [vmem:[#allocation14 + $0x320] sm:$0xff]
    %v540 = vld [vmem:[#allocation14 + $0x328] sm:$0xff]
    %v541 = vld [vmem:[#allocation14 + $0x330] sm:$0xff]
    %v542 = vld [vmem:[#allocation14 + $0x338] sm:$0xff]
    %v543 = vld [vmem:[#allocation14 + $0x340] sm:$0xff]
    %v544 = vld [vmem:[#allocation14 + $0x348] sm:$0xff]
    %v545 = vld [vmem:[#allocation14 + $0x350] sm:$0xff]
    %v546 = vld [vmem:[#allocation14 + $0x358] sm:$0xff]
    %v547 = vld [vmem:[#allocation14 + $0x360] sm:$0xff]
    %v548 = vld [vmem:[#allocation14 + $0x368] sm:$0xff]
    %v549 = vld [vmem:[#allocation14 + $0x370] sm:$0xff]
    %v550 = vld [vmem:[#allocation14 + $0x378] sm:$0xff]
    %v551 = vld [vmem:[#allocation14 + $0x380] sm:$0xff]
    %v552 = vld [vmem:[#allocation14 + $0x388] sm:$0xff]
    %v553 = vld [vmem:[#allocation14 + $0x390] sm:$0xff]
    %v554 = vld [vmem:[#allocation14 + $0x398] sm:$0xff]
    %v555 = vld [vmem:[#allocation14 + $0x3a0] sm:$0xff]
    %v556 = vld [vmem:[#allocation14 + $0x3a8] sm:$0xff]
    %v557 = vld [vmem:[#allocation14 + $0x3b0] sm:$0xff]
    %v558 = vld [vmem:[#allocation14 + $0x3b8] sm:$0xff]
    %v559 = vld [vmem:[#allocation14 + $0x3c0] sm:$0xff]
    %v560 = vld [vmem:[#allocation14 + $0x3c8] sm:$0xff]
    %v561 = vld [vmem:[#allocation14 + $0x3d0] sm:$0xff]
    %v562 = vld [vmem:[#allocation14 + $0x3d8] sm:$0xff]
    %v563 = vld [vmem:[#allocation14 + $0x3e0] sm:$0xff]
    %v564 = vld [vmem:[#allocation14 + $0x3e8] sm:$0xff]
    %v565 = vld [vmem:[#allocation14 + $0x3f0] sm:$0xff]
    %v566 = vld [vmem:[#allocation14 + $0x3f8] sm:$0xff]
    %v567 = vld [vmem:[%s10] sm:$0xf]
    %v568 = vld [vmem:[%s11] sm:$0xf]
    %569 = vmatprep.subr.mxu0 %v440
    %570 = vmatpush1.msra.mxu0 %v439
    %571 = vmatprep.subr.mxu0 %v444
    %572 = vmatpush1.msra.mxu0 %v443
    %573 = vmatprep.subr.mxu0 %v448
    %574 = vmatpush1.msra.mxu0 %v447
    %575 = vmatprep.subr.mxu0 %v452
    %576 = vmatpush1.msra.mxu0 %v451
    %577 = vmatprep.subr.mxu0 %v456
    %578 = vmatpush1.msra.mxu0 %v455
    %579 = vmatprep.subr.mxu0 %v460
    %580 = vmatpush1.msra.mxu0 %v459
    %581 = vmatprep.subr.mxu0 %v464
    %582 = vmatpush1.msra.mxu0 %v463
    %583 = vmatprep.subr.mxu0 %v468
    %584 = vmatpush1.msra.mxu0 %v467
    %585 = vmatprep.subr.mxu0 %v472
    %586 = vmatpush1.msra.mxu0 %v471
    %587 = vmatprep.subr.mxu0 %v476
    %588 = vmatpush1.msra.mxu0 %v475
    %589 = vmatprep.subr.mxu0 %v480
    %590 = vmatpush1.msra.mxu0 %v479
    %591 = vmatprep.subr.mxu0 %v484
    %592 = vmatpush1.msra.mxu0 %v483
    %593 = vmatprep.subr.mxu0 %v488
    %594 = vmatpush1.msra.mxu0 %v487
    %595 = vmatprep.subr.mxu0 %v492
    %596 = vmatpush1.msra.mxu0 %v491
    %597 = vmatprep.subr.mxu0 %v496
    %598 = vmatpush1.msra.mxu0 %v495
    %599 = vmatprep.subr.mxu0 %v500
    %600 = vmatpush1.msra.mxu0 %v499
    %601 = vmatprep.subr.mxu0 %v504
    %602 = vmatpush1.msra.mxu0 %v503
    %603 = vmatprep.subr.mxu0 %v508
    %604 = vmatpush1.msra.mxu0 %v507
    %605 = vmatprep.subr.mxu0 %v512
    %606 = vmatpush1.msra.mxu0 %v511
    %607 = vmatprep.subr.mxu0 %v516
    %608 = vmatpush1.msra.mxu0 %v515
    %609 = vmatprep.subr.mxu0 %v520
    %610 = vmatpush1.msra.mxu0 %v519
    %611 = vmatprep.subr.mxu0 %v524
    %612 = vmatpush1.msra.mxu0 %v523
    %613 = vmatprep.subr.mxu0 %v528
    %614 = vmatpush1.msra.mxu0 %v527
    %615 = vmatprep.subr.mxu0 %v532
    %616 = vmatpush1.msra.mxu0 %v531
    %617 = vmatprep.subr.mxu0 %v536
    %618 = vmatpush1.msra.mxu0 %v535
    %619 = vmatprep.subr.mxu0 %v540
    %620 = vmatpush1.msra.mxu0 %v539
    %621 = vmatprep.subr.mxu0 %v544
    %622 = vmatpush1.msra.mxu0 %v543
    %623 = vmatprep.subr.mxu0 %v548
    %624 = vmatpush1.msra.mxu0 %v547
    %625 = vmatprep.subr.mxu0 %v552
    %626 = vmatpush1.msra.mxu0 %v551
    %627 = vmatprep.subr.mxu0 %v556
    %628 = vmatpush1.msra.mxu0 %v555
    %629 = vmatprep.subr.mxu0 %v560
    %630 = vmatpush1.msra.mxu0 %v559
    %631 = vmatprep.subr.mxu0 %v564
    %632 = vmatpush1.msra.mxu0 %v563
    %633 = vmatprep.mubr.f32.mxu0 %v436
    %634 = vmatmul.mubr.f32.gmra.mrb[0].mxu0 %v435
    %v635 = vpop.f32.mrb[0].mxu0
    %v636 = vadd.f32 0.0, %v635
    %v637 = vpop.f32.mrb[0].mxu0
    %v638 = vadd.f32 0.0, %v637
    %639 = vmatprep.mubr.f32.mxu0 %v438
    %640 = vmatmul.mubr.f32.gmra.mrb[0].mxu0 %v437
    %v641 = vpop.f32.mrb[0].mxu0
    %v642 = vadd.f32 0.0, %v641
    %v643 = vpop.f32.mrb[0].mxu0
    %v644 = vadd.f32 0.0, %v643
    %645 = vdwg.mxu0
    %646 = vmatprep.subr.mxu0 %v442
    %647 = vmatpush1.msra.mxu0 %v441
    %648 = vmatprep.subr.mxu0 %v446
    %649 = vmatpush1.msra.mxu0 %v445
    %650 = vmatprep.subr.mxu0 %v450
    %651 = vmatpush1.msra.mxu0 %v449
    %652 = vmatprep.subr.mxu0 %v454
    %653 = vmatpush1.msra.mxu0 %v453
    %654 = vmatprep.subr.mxu0 %v458
    %655 = vmatpush1.msra.mxu0 %v457
    %656 = vmatprep.subr.mxu0 %v462
    %657 = vmatpush1.msra.mxu0 %v461
    %658 = vmatprep.subr.mxu0 %v466
    %659 = vmatpush1.msra.mxu0 %v465
    %660 = vmatprep.subr.mxu0 %v470
    %661 = vmatpush1.msra.mxu0 %v469
    %662 = vmatprep.subr.mxu0 %v474
    %663 = vmatpush1.msra.mxu0 %v473
    %664 = vmatprep.subr.mxu0 %v478
    %665 = vmatpush1.msra.mxu0 %v477
    %666 = vmatprep.subr.mxu0 %v482
    %667 = vmatpush1.msra.mxu0 %v481
    %668 = vmatprep.subr.mxu0 %v486
    %669 = vmatpush1.msra.mxu0 %v485
    %670 = vmatprep.subr.mxu0 %v490
    %671 = vmatpush1.msra.mxu0 %v489
    %672 = vmatprep.subr.mxu0 %v494
    %673 = vmatpush1.msra.mxu0 %v493
    %674 = vmatprep.subr.mxu0 %v498
    %675 = vmatpush1.msra.mxu0 %v497
    %676 = vmatprep.subr.mxu0 %v502
    %677 = vmatpush1.msra.mxu0 %v501
    %678 = vmatprep.subr.mxu0 %v506
    %679 = vmatpush1.msra.mxu0 %v505
    %680 = vmatprep.subr.mxu0 %v510
    %681 = vmatpush1.msra.mxu0 %v509
    %682 = vmatprep.subr.mxu0 %v514
    %683 = vmatpush1.msra.mxu0 %v513
    %684 = vmatprep.subr.mxu0 %v518
    %685 = vmatpush1.msra.mxu0 %v517
    %686 = vmatprep.subr.mxu0 %v522
    %687 = vmatpush1.msra.mxu0 %v521
    %688 = vmatprep.subr.mxu0 %v526
    %689 = vmatpush1.msra.mxu0 %v525
    %690 = vmatprep.subr.mxu0 %v530
    %691 = vmatpush1.msra.mxu0 %v529
    %692 = vmatprep.subr.mxu0 %v534
    %693 = vmatpush1.msra.mxu0 %v533
    %694 = vmatprep.subr.mxu0 %v538
    %695 = vmatpush1.msra.mxu0 %v537
    %696 = vmatprep.subr.mxu0 %v542
    %697 = vmatpush1.msra.mxu0 %v541
    %698 = vmatprep.subr.mxu0 %v546
    %699 = vmatpush1.msra.mxu0 %v545
    %700 = vmatprep.subr.mxu0 %v550
    %701 = vmatpush1.msra.mxu0 %v549
    %702 = vmatprep.subr.mxu0 %v554
    %703 = vmatpush1.msra.mxu0 %v553
    %704 = vmatprep.subr.mxu0 %v558
    %705 = vmatpush1.msra.mxu0 %v557
    %706 = vmatprep.subr.mxu0 %v562
    %707 = vmatpush1.msra.mxu0 %v561
    %708 = vmatprep.subr.mxu0 %v566
    %709 = vmatpush1.msra.mxu0 %v565
    %710 = vmatprep.mubr.f32.mxu0 %v436
    %711 = vmatmul.mubr.f32.gmra.mrb[0].mxu0 %v435
    %v712 = vpop.f32.mrb[0].mxu0
    %v713 = vadd.f32 0.0, %v712
    %v714 = vpop.f32.mrb[0].mxu0
    %v715 = vadd.f32 0.0, %v714
    %716 = vmatprep.mubr.f32.mxu0 %v438
    %717 = vmatmul.mubr.f32.gmra.mrb[0].mxu0 %v437
    %v718 = vpop.f32.mrb[0].mxu0
    %v719 = vadd.f32 0.0, %v718
    %v720 = vpop.f32.mrb[0].mxu0
    %v721 = vadd.f32 0.0, %v720
    %722 = vdwg.mxu0
    %v724 = vlaneseq
    %v725 = vshrl.u32 %v724, 7
    %v726 = vsub.s32 0, %v725
    %v727 = vrot.slane %v567, %v726
    %v728 = vlaneseq
    %v729 = vshrl.u32 %v728, 7
    %v730 = vsub.s32 1, %v729
    %v731 = vrot.slane %v567, %v730
    %v732 = vlaneseq
    %v733 = vshrl.u32 %v732, 7
    %v734 = vsub.s32 2, %v733
    %v735 = vrot.slane %v567, %v734
    %v736 = vlaneseq
    %v737 = vshrl.u32 %v736, 7
    %v738 = vsub.s32 3, %v737
    %v739 = vrot.slane %v567, %v738
    %v744 = vmul.f32 %v636, %v727
    %v745 = vmul.f32 %v638, %v731
    %v746 = vmul.f32 %v713, %v735
    %v747 = vmul.f32 %v715, %v739
    %v748 = vmul.f32 %v642, %v727
    %v749 = vmul.f32 %v644, %v731
    %v750 = vmul.f32 %v719, %v735
    %v751 = vmul.f32 %v721, %v739
    %v753 = vlaneseq
    %v754 = vshrl.u32 %v753, 7
    %v755 = vsub.s32 0, %v754
    %v756 = vrot.slane %v568, %v755
    %v757 = vlaneseq
    %v758 = vshrl.u32 %v757, 7
    %v759 = vsub.s32 1, %v758
    %v760 = vrot.slane %v568, %v759
    %v761 = vlaneseq
    %v762 = vshrl.u32 %v761, 7
    %v763 = vsub.s32 2, %v762
    %v764 = vrot.slane %v568, %v763
    %v765 = vlaneseq
    %v766 = vshrl.u32 %v765, 7
    %v767 = vsub.s32 3, %v766
    %v768 = vrot.slane %v568, %v767
    %v773 = vadd.f32 %v744, %v756
    %v774 = vadd.f32 %v745, %v760
    %v775 = vadd.f32 %v746, %v764
    %v776 = vadd.f32 %v747, %v768
    %v777 = vadd.f32 %v748, %v756
    %v778 = vadd.f32 %v749, %v760
    %v779 = vadd.f32 %v750, %v764
    %v780 = vadd.f32 %v751, %v768
    %v781 = vmax.f32 %v773, 0.0
    %v782 = vmax.f32 %v774, 0.0
    %v783 = vmax.f32 %v775, 0.0
    %v784 = vmax.f32 %v776, 0.0
    %v785 = vmax.f32 %v777, 0.0
    %v786 = vmax.f32 %v778, 0.0
    %v787 = vmax.f32 %v779, 0.0
    %v788 = vmax.f32 %v780, 0.0
    %789 = vst [vmem:[#allocation17] sm:$0xff] %v781
    %790 = vst [vmem:[#allocation17 + $0x8] sm:$0xff] %v782
    %791 = vst [vmem:[#allocation17 + $0x10] sm:$0xff] %v783
    %792 = vst [vmem:[#allocation17 + $0x18] sm:$0xff] %v784
    %793 = vst [vmem:[#allocation17 + $0x20] sm:$0xff] %v785
    %794 = vst [vmem:[#allocation17 + $0x28] sm:$0xff] %v786
    %795 = vst [vmem:[#allocation17 + $0x30] sm:$0xff] %v787
    %796 = vst [vmem:[#allocation17 + $0x38] sm:$0xff] %v788
    %v797 = vld [vmem:[#allocation16] sm:$0xff]
    %v798 = vld [vmem:[#allocation16 + $0x8] sm:$0xff]
    %v799 = vld [vmem:[#allocation16 + $0x10] sm:$0xff]
    %v800 = vld [vmem:[#allocation16 + $0x18] sm:$0xff]
    %v801 = vld [vmem:[#allocation16 + $0x20] sm:$0xff]
    %v802 = vld [vmem:[#allocation16 + $0x28] sm:$0xff]
    %v803 = vld [vmem:[#allocation16 + $0x30] sm:$0xff]
    %v804 = vld [vmem:[#allocation16 + $0x38] sm:$0xff]
    %v805 = vld [vmem:[#allocation16 + $0x40] sm:$0xff]
    %v806 = vld [vmem:[#allocation16 + $0x48] sm:$0xff]
    %v807 = vld [vmem:[#allocation16 + $0x50] sm:$0xff]
    %v808 = vld [vmem:[#allocation16 + $0x58] sm:$0xff]
    %v809 = vld [vmem:[#allocation16 + $0x60] sm:$0xff]
    %v810 = vld [vmem:[#allocation16 + $0x68] sm:$0xff]
    %v811 = vld [vmem:[#allocation16 + $0x70] sm:$0xff]
    %v812 = vld [vmem:[#allocation16 + $0x78] sm:$0xff]
    %v813 = vld [vmem:[#allocation16 + $0x80] sm:$0xff]
    %v814 = vld [vmem:[#allocation16 + $0x88] sm:$0xff]
    %v815 = vld [vmem:[#allocation16 + $0x90] sm:$0xff]
    %v816 = vld [vmem:[#allocation16 + $0x98] sm:$0xff]
    %v817 = vld [vmem:[#allocation16 + $0xa0] sm:$0xff]
    %v818 = vld [vmem:[#allocation16 + $0xa8] sm:$0xff]
    %v819 = vld [vmem:[#allocation16 + $0xb0] sm:$0xff]
    %v820 = vld [vmem:[#allocation16 + $0xb8] sm:$0xff]
    %v821 = vld [vmem:[#allocation16 + $0xc0] sm:$0xff]
    %v822 = vld [vmem:[#allocation16 + $0xc8] sm:$0xff]
    %v823 = vld [vmem:[#allocation16 + $0xd0] sm:$0xff]
    %v824 = vld [vmem:[#allocation16 + $0xd8] sm:$0xff]
    %v825 = vld [vmem:[#allocation16 + $0xe0] sm:$0xff]
    %v826 = vld [vmem:[#allocation16 + $0xe8] sm:$0xff]
    %v827 = vld [vmem:[#allocation16 + $0xf0] sm:$0xff]
    %v828 = vld [vmem:[#allocation16 + $0xf8] sm:$0xff]
    %v829 = vld [vmem:[#allocation16 + $0x100] sm:$0xff]
    %v830 = vld [vmem:[#allocation16 + $0x108] sm:$0xff]
    %v831 = vld [vmem:[#allocation16 + $0x110] sm:$0xff]
    %v832 = vld [vmem:[#allocation16 + $0x118] sm:$0xff]
    %v833 = vld [vmem:[#allocation16 + $0x120] sm:$0xff]
    %v834 = vld [vmem:[#allocation16 + $0x128] sm:$0xff]
    %v835 = vld [vmem:[#allocation16 + $0x130] sm:$0xff]
    %v836 = vld [vmem:[#allocation16 + $0x138] sm:$0xff]
    %v837 = vld [vmem:[#allocation16 + $0x140] sm:$0xff]
    %v838 = vld [vmem:[#allocation16 + $0x148] sm:$0xff]
    %v839 = vld [vmem:[#allocation16 + $0x150] sm:$0xff]
    %v840 = vld [vmem:[#allocation16 + $0x158] sm:$0xff]
    %v841 = vld [vmem:[#allocation16 + $0x160] sm:$0xff]
    %v842 = vld [vmem:[#allocation16 + $0x168] sm:$0xff]
    %v843 = vld [vmem:[#allocation16 + $0x170] sm:$0xff]
    %v844 = vld [vmem:[#allocation16 + $0x178] sm:$0xff]
    %v845 = vld [vmem:[#allocation16 + $0x180] sm:$0xff]
    %v846 = vld [vmem:[#allocation16 + $0x188] sm:$0xff]
    %v847 = vld [vmem:[#allocation16 + $0x190] sm:$0xff]
    %v848 = vld [vmem:[#allocation16 + $0x198] sm:$0xff]
    %v849 = vld [vmem:[#allocation16 + $0x1a0] sm:$0xff]
    %v850 = vld [vmem:[#allocation16 + $0x1a8] sm:$0xff]
    %v851 = vld [vmem:[#allocation16 + $0x1b0] sm:$0xff]
    %v852 = vld [vmem:[#allocation16 + $0x1b8] sm:$0xff]
    %v853 = vld [vmem:[#allocation16 + $0x1c0] sm:$0xff]
    %v854 = vld [vmem:[#allocation16 + $0x1c8] sm:$0xff]
    %v855 = vld [vmem:[#allocation16 + $0x1d0] sm:$0xff]
    %v856 = vld [vmem:[#allocation16 + $0x1d8] sm:$0xff]
    %v857 = vld [vmem:[#allocation16 + $0x1e0] sm:$0xff]
    %v858 = vld [vmem:[#allocation16 + $0x1e8] sm:$0xff]
    %v859 = vld [vmem:[#allocation16 + $0x1f0] sm:$0xff]
    %v860 = vld [vmem:[#allocation16 + $0x1f8] sm:$0xff]
    %v861 = vld [vmem:[#allocation16 + $0x200] sm:$0xff]
    %v862 = vld [vmem:[#allocation16 + $0x208] sm:$0xff]
    %v863 = vld [vmem:[#allocation16 + $0x210] sm:$0xff]
    %v864 = vld [vmem:[#allocation16 + $0x218] sm:$0xff]
    %v865 = vld [vmem:[#allocation16 + $0x220] sm:$0xff]
    %v866 = vld [vmem:[#allocation16 + $0x228] sm:$0xff]
    %v867 = vld [vmem:[#allocation16 + $0x230] sm:$0xff]
    %v868 = vld [vmem:[#allocation16 + $0x238] sm:$0xff]
    %v869 = vld [vmem:[#allocation16 + $0x240] sm:$0xff]
    %v870 = vld [vmem:[#allocation16 + $0x248] sm:$0xff]
    %v871 = vld [vmem:[#allocation16 + $0x250] sm:$0xff]
    %v872 = vld [vmem:[#allocation16 + $0x258] sm:$0xff]
    %v873 = vld [vmem:[#allocation16 + $0x260] sm:$0xff]
    %v874 = vld [vmem:[#allocation16 + $0x268] sm:$0xff]
    %v875 = vld [vmem:[#allocation16 + $0x270] sm:$0xff]
    %v876 = vld [vmem:[#allocation16 + $0x278] sm:$0xff]
    %v877 = vld [vmem:[#allocation16 + $0x280] sm:$0xff]
    %v878 = vld [vmem:[#allocation16 + $0x288] sm:$0xff]
    %v879 = vld [vmem:[#allocation16 + $0x290] sm:$0xff]
    %v880 = vld [vmem:[#allocation16 + $0x298] sm:$0xff]
    %v881 = vld [vmem:[#allocation16 + $0x2a0] sm:$0xff]
    %v882 = vld [vmem:[#allocation16 + $0x2a8] sm:$0xff]
    %v883 = vld [vmem:[#allocation16 + $0x2b0] sm:$0xff]
    %v884 = vld [vmem:[#allocation16 + $0x2b8] sm:$0xff]
    %v885 = vld [vmem:[#allocation16 + $0x2c0] sm:$0xff]
    %v886 = vld [vmem:[#allocation16 + $0x2c8] sm:$0xff]
    %v887 = vld [vmem:[#allocation16 + $0x2d0] sm:$0xff]
    %v888 = vld [vmem:[#allocation16 + $0x2d8] sm:$0xff]
    %v889 = vld [vmem:[#allocation16 + $0x2e0] sm:$0xff]
    %v890 = vld [vmem:[#allocation16 + $0x2e8] sm:$0xff]
    %v891 = vld [vmem:[#allocation16 + $0x2f0] sm:$0xff]
    %v892 = vld [vmem:[#allocation16 + $0x2f8] sm:$0xff]
    %v893 = vld [vmem:[#allocation16 + $0x300] sm:$0xff]
    %v894 = vld [vmem:[#allocation16 + $0x308] sm:$0xff]
    %v895 = vld [vmem:[#allocation16 + $0x310] sm:$0xff]
    %v896 = vld [vmem:[#allocation16 + $0x318] sm:$0xff]
    %v897 = vld [vmem:[#allocation16 + $0x320] sm:$0xff]
    %v898 = vld [vmem:[#allocation16 + $0x328] sm:$0xff]
    %v899 = vld [vmem:[#allocation16 + $0x330] sm:$0xff]
    %v900 = vld [vmem:[#allocation16 + $0x338] sm:$0xff]
    %v901 = vld [vmem:[#allocation16 + $0x340] sm:$0xff]
    %v902 = vld [vmem:[#allocation16 + $0x348] sm:$0xff]
    %v903 = vld [vmem:[#allocation16 + $0x350] sm:$0xff]
    %v904 = vld [vmem:[#allocation16 + $0x358] sm:$0xff]
    %v905 = vld [vmem:[#allocation16 + $0x360] sm:$0xff]
    %v906 = vld [vmem:[#allocation16 + $0x368] sm:$0xff]
    %v907 = vld [vmem:[#allocation16 + $0x370] sm:$0xff]
    %v908 = vld [vmem:[#allocation16 + $0x378] sm:$0xff]
    %v909 = vld [vmem:[#allocation16 + $0x380] sm:$0xff]
    %v910 = vld [vmem:[#allocation16 + $0x388] sm:$0xff]
    %v911 = vld [vmem:[#allocation16 + $0x390] sm:$0xff]
    %v912 = vld [vmem:[#allocation16 + $0x398] sm:$0xff]
    %v913 = vld [vmem:[#allocation16 + $0x3a0] sm:$0xff]
    %v914 = vld [vmem:[#allocation16 + $0x3a8] sm:$0xff]
    %v915 = vld [vmem:[#allocation16 + $0x3b0] sm:$0xff]
    %v916 = vld [vmem:[#allocation16 + $0x3b8] sm:$0xff]
    %v917 = vld [vmem:[#allocation16 + $0x3c0] sm:$0xff]
    %v918 = vld [vmem:[#allocation16 + $0x3c8] sm:$0xff]
    %v919 = vld [vmem:[#allocation16 + $0x3d0] sm:$0xff]
    %v920 = vld [vmem:[#allocation16 + $0x3d8] sm:$0xff]
    %v921 = vld [vmem:[#allocation16 + $0x3e0] sm:$0xff]
    %v922 = vld [vmem:[#allocation16 + $0x3e8] sm:$0xff]
    %v923 = vld [vmem:[#allocation16 + $0x3f0] sm:$0xff]
    %v924 = vld [vmem:[#allocation16 + $0x3f8] sm:$0xff]
    %v925 = vld [vmem:[%s13] sm:$0xf]
    %v926 = vld [vmem:[%s14] sm:$0xf]
    %927 = vmatprep.subr.mxu0 %v798
    %928 = vmatpush1.msra.mxu0 %v797
    %929 = vmatprep.subr.mxu0 %v802
    %930 = vmatpush1.msra.mxu0 %v801
    %931 = vmatprep.subr.mxu0 %v806
    %932 = vmatpush1.msra.mxu0 %v805
    %933 = vmatprep.subr.mxu0 %v810
    %934 = vmatpush1.msra.mxu0 %v809
    %935 = vmatprep.subr.mxu0 %v814
    %936 = vmatpush1.msra.mxu0 %v813
    %937 = vmatprep.subr.mxu0 %v818
    %938 = vmatpush1.msra.mxu0 %v817
    %939 = vmatprep.subr.mxu0 %v822
    %940 = vmatpush1.msra.mxu0 %v821
    %941 = vmatprep.subr.mxu0 %v826
    %942 = vmatpush1.msra.mxu0 %v825
    %943 = vmatprep.subr.mxu0 %v830
    %944 = vmatpush1.msra.mxu0 %v829
    %945 = vmatprep.subr.mxu0 %v834
    %946 = vmatpush1.msra.mxu0 %v833
    %947 = vmatprep.subr.mxu0 %v838
    %948 = vmatpush1.msra.mxu0 %v837
    %949 = vmatprep.subr.mxu0 %v842
    %950 = vmatpush1.msra.mxu0 %v841
    %951 = vmatprep.subr.mxu0 %v846
    %952 = vmatpush1.msra.mxu0 %v845
    %953 = vmatprep.subr.mxu0 %v850
    %954 = vmatpush1.msra.mxu0 %v849
    %955 = vmatprep.subr.mxu0 %v854
    %956 = vmatpush1.msra.mxu0 %v853
    %957 = vmatprep.subr.mxu0 %v858
    %958 = vmatpush1.msra.mxu0 %v857
    %959 = vmatprep.subr.mxu0 %v862
    %960 = vmatpush1.msra.mxu0 %v861
    %961 = vmatprep.subr.mxu0 %v866
    %962 = vmatpush1.msra.mxu0 %v865
    %963 = vmatprep.subr.mxu0 %v870
    %964 = vmatpush1.msra.mxu0 %v869
    %965 = vmatprep.subr.mxu0 %v874
    %966 = vmatpush1.msra.mxu0 %v873
    %967 = vmatprep.subr.mxu0 %v878
    %968 = vmatpush1.msra.mxu0 %v877
    %969 = vmatprep.subr.mxu0 %v882
    %970 = vmatpush1.msra.mxu0 %v881
    %971 = vmatprep.subr.mxu0 %v886
    %972 = vmatpush1.msra.mxu0 %v885
    %973 = vmatprep.subr.mxu0 %v890
    %974 = vmatpush1.msra.mxu0 %v889
    %975 = vmatprep.subr.mxu0 %v894
    %976 = vmatpush1.msra.mxu0 %v893
    %977 = vmatprep.subr.mxu0 %v898
    %978 = vmatpush1.msra.mxu0 %v897
    %979 = vmatprep.subr.mxu0 %v902
    %980 = vmatpush1.msra.mxu0 %v901
    %981 = vmatprep.subr.mxu0 %v906
    %982 = vmatpush1.msra.mxu0 %v905
    %983 = vmatprep.subr.mxu0 %v910
    %984 = vmatpush1.msra.mxu0 %v909
    %985 = vmatprep.subr.mxu0 %v914
    %986 = vmatpush1.msra.mxu0 %v913
    %987 = vmatprep.subr.mxu0 %v918
    %988 = vmatpush1.msra.mxu0 %v917
    %989 = vmatprep.subr.mxu0 %v922
    %990 = vmatpush1.msra.mxu0 %v921
    %991 = vmatprep.mubr.f32.mxu0 %v436
    %992 = vmatmul.mubr.f32.gmra.mrb[0].mxu0 %v435
    %v993 = vpop.f32.mrb[0].mxu0
    %v994 = vadd.f32 0.0, %v993
    %v995 = vpop.f32.mrb[0].mxu0
    %v996 = vadd.f32 0.0, %v995
    %997 = vmatprep.mubr.f32.mxu0 %v438
    %998 = vmatmul.mubr.f32.gmra.mrb[0].mxu0 %v437
    %v999 = vpop.f32.mrb[0].mxu0
    %v1000 = vadd.f32 0.0, %v999
    %v1001 = vpop.f32.mrb[0].mxu0
    %v1002 = vadd.f32 0.0, %v1001
    %1003 = vdwg.mxu0
    %1004 = vmatprep.subr.mxu0 %v800
    %1005 = vmatpush1.msra.mxu0 %v799
    %1006 = vmatprep.subr.mxu0 %v804
    %1007 = vmatpush1.msra.mxu0 %v803
    %1008 = vmatprep.subr.mxu0 %v808
    %1009 = vmatpush1.msra.mxu0 %v807
    %1010 = vmatprep.subr.mxu0 %v812
    %1011 = vmatpush1.msra.mxu0 %v811
    %1012 = vmatprep.subr.mxu0 %v816
    %1013 = vmatpush1.msra.mxu0 %v815
    %1014 = vmatprep.subr.mxu0 %v820
    %1015 = vmatpush1.msra.mxu0 %v819
    %1016 = vmatprep.subr.mxu0 %v824
    %1017 = vmatpush1.msra.mxu0 %v823
    %1018 = vmatprep.subr.mxu0 %v828
    %1019 = vmatpush1.msra.mxu0 %v827
    %1020 = vmatprep.subr.mxu0 %v832
    %1021 = vmatpush1.msra.mxu0 %v831
    %1022 = vmatprep.subr.mxu0 %v836
    %1023 = vmatpush1.msra.mxu0 %v835
    %1024 = vmatprep.subr.mxu0 %v840
    %1025 = vmatpush1.msra.mxu0 %v839
    %1026 = vmatprep.subr.mxu0 %v844
    %1027 = vmatpush1.msra.mxu0 %v843
    %1028 = vmatprep.subr.mxu0 %v848
    %1029 = vmatpush1.msra.mxu0 %v847
    %1030 = vmatprep.subr.mxu0 %v852
    %1031 = vmatpush1.msra.mxu0 %v851
    %1032 = vmatprep.subr.mxu0 %v856
    %1033 = vmatpush1.msra.mxu0 %v855
    %1034 = vmatprep.subr.mxu0 %v860
    %1035 = vmatpush1.msra.mxu0 %v859
    %1036 = vmatprep.subr.mxu0 %v864
    %1037 = vmatpush1.msra.mxu0 %v863
    %1038 = vmatprep.subr.mxu0 %v868
    %1039 = vmatpush1.msra.mxu0 %v867
    %1040 = vmatprep.subr.mxu0 %v872
    %1041 = vmatpush1.msra.mxu0 %v871
    %1042 = vmatprep.subr.mxu0 %v876
    %1043 = vmatpush1.msra.mxu0 %v875
    %1044 = vmatprep.subr.mxu0 %v880
    %1045 = vmatpush1.msra.mxu0 %v879
    %1046 = vmatprep.subr.mxu0 %v884
    %1047 = vmatpush1.msra.mxu0 %v883
    %1048 = vmatprep.subr.mxu0 %v888
    %1049 = vmatpush1.msra.mxu0 %v887
    %1050 = vmatprep.subr.mxu0 %v892
    %1051 = vmatpush1.msra.mxu0 %v891
    %1052 = vmatprep.subr.mxu0 %v896
    %1053 = vmatpush1.msra.mxu0 %v895
    %1054 = vmatprep.subr.mxu0 %v900
    %1055 = vmatpush1.msra.mxu0 %v899
    %1056 = vmatprep.subr.mxu0 %v904
    %1057 = vmatpush1.msra.mxu0 %v903
    %1058 = vmatprep.subr.mxu0 %v908
    %1059 = vmatpush1.msra.mxu0 %v907
    %1060 = vmatprep.subr.mxu0 %v912
    %1061 = vmatpush1.msra.mxu0 %v911
    %1062 = vmatprep.subr.mxu0 %v916
    %1063 = vmatpush1.msra.mxu0 %v915
    %1064 = vmatprep.subr.mxu0 %v920
    %1065 = vmatpush1.msra.mxu0 %v919
    %1066 = vmatprep.subr.mxu0 %v924
    %1067 = vmatpush1.msra.mxu0 %v923
    %1068 = vmatprep.mubr.f32.mxu0 %v436
    %1069 = vmatmul.mubr.f32.gmra.mrb[0].mxu0 %v435
    %v1070 = vpop.f32.mrb[0].mxu0
    %v1071 = vadd.f32 0.0, %v1070
    %v1072 = vpop.f32.mrb[0].mxu0
    %v1073 = vadd.f32 0.0, %v1072
    %1074 = vmatprep.mubr.f32.mxu0 %v438
    %1075 = vmatmul.mubr.f32.gmra.mrb[0].mxu0 %v437
    %v1076 = vpop.f32.mrb[0].mxu0
    %v1077 = vadd.f32 0.0, %v1076
    %v1078 = vpop.f32.mrb[0].mxu0
    %v1079 = vadd.f32 0.0, %v1078
    %1080 = vdwg.mxu0
    %v1082 = vlaneseq
    %v1083 = vshrl.u32 %v1082, 7
    %v1084 = vsub.s32 0, %v1083
    %v1085 = vrot.slane %v925, %v1084
    %v1086 = vlaneseq
    %v1087 = vshrl.u32 %v1086, 7
    %v1088 = vsub.s32 1, %v1087
    %v1089 = vrot.slane %v925, %v1088
    %v1090 = vlaneseq
    %v1091 = vshrl.u32 %v1090, 7
    %v1092 = vsub.s32 2, %v1091
    %v1093 = vrot.slane %v925, %v1092
    %v1094 = vlaneseq
    %v1095 = vshrl.u32 %v1094, 7
    %v1096 = vsub.s32 3, %v1095
    %v1097 = vrot.slane %v925, %v1096
    %v1102 = vmul.f32 %v994, %v1085
    %v1103 = vmul.f32 %v996, %v1089
    %v1104 = vmul.f32 %v1071, %v1093
    %v1105 = vmul.f32 %v1073, %v1097
    %v1106 = vmul.f32 %v1000, %v1085
    %v1107 = vmul.f32 %v1002, %v1089
    %v1108 = vmul.f32 %v1077, %v1093
    %v1109 = vmul.f32 %v1079, %v1097
    %v1111 = vlaneseq
    %v1112 = vshrl.u32 %v1111, 7
    %v1113 = vsub.s32 0, %v1112
    %v1114 = vrot.slane %v926, %v1113
    %v1115 = vlaneseq
    %v1116 = vshrl.u32 %v1115, 7
    %v1117 = vsub.s32 1, %v1116
    %v1118 = vrot.slane %v926, %v1117
    %v1119 = vlaneseq
    %v1120 = vshrl.u32 %v1119, 7
    %v1121 = vsub.s32 2, %v1120
    %v1122 = vrot.slane %v926, %v1121
    %v1123 = vlaneseq
    %v1124 = vshrl.u32 %v1123, 7
    %v1125 = vsub.s32 3, %v1124
    %v1126 = vrot.slane %v926, %v1125
    %v1131 = vadd.f32 %v1102, %v1114
    %v1132 = vadd.f32 %v1103, %v1118
    %v1133 = vadd.f32 %v1104, %v1122
    %v1134 = vadd.f32 %v1105, %v1126
    %v1135 = vadd.f32 %v1106, %v1114
    %v1136 = vadd.f32 %v1107, %v1118
    %v1137 = vadd.f32 %v1108, %v1122
    %v1138 = vadd.f32 %v1109, %v1126
    %v1139 = vmax.f32 %v1131, 0.0
    %v1140 = vmax.f32 %v1132, 0.0
    %v1141 = vmax.f32 %v1133, 0.0
    %v1142 = vmax.f32 %v1134, 0.0
    %v1143 = vmax.f32 %v1135, 0.0
    %v1144 = vmax.f32 %v1136, 0.0
    %v1145 = vmax.f32 %v1137, 0.0
    %v1146 = vmax.f32 %v1138, 0.0
    %1147 = vst [vmem:[#allocation18] sm:$0xff] %v1139
    %1148 = vst [vmem:[#allocation18 + $0x8] sm:$0xff] %v1140
    %1149 = vst [vmem:[#allocation18 + $0x10] sm:$0xff] %v1141
    %1150 = vst [vmem:[#allocation18 + $0x18] sm:$0xff] %v1142
    %1151 = vst [vmem:[#allocation18 + $0x20] sm:$0xff] %v1143
    %1152 = vst [vmem:[#allocation18 + $0x28] sm:$0xff] %v1144
    %1153 = vst [vmem:[#allocation18 + $0x30] sm:$0xff] %v1145
    %1154 = vst [vmem:[#allocation18 + $0x38] sm:$0xff] %v1146
    // Predicated region
    $region98: #{tpu_custom_call.1} parent=1 // pred_check
      _
    $region99: #{tpu_custom_call.1} parent=1 // pred_check_branch
      %1156 = sbr.rel (0) target = $region101
    $region100: #{tpu_custom_call.1} parent=1 // pred_region
      %s1158 = ssub.s32 1024, 1024
      %1159 = vsyncadd [#allocation4], %s1158
      %s1160 = sshll.u32 [#allocation17], 4
      %s1161 = int_to_ptr.vmem [resolvable:$true] %s1160
      %1166 = dma.vmem_to_hbm [thread:$0]  %s1161, 1024, %s15, [#allocation4], 512, 512, 32
    $region101: #{tpu_custom_call.1} parent=1 // pred_fallthru
      _
    // Predicated region
    $region102: #{tpu_custom_call.1} parent=1 // pred_check
      _
    $region103: #{tpu_custom_call.1} parent=1 // pred_check_branch
      %1168 = sbr.rel (0) target = $region105
    $region104: #{tpu_custom_call.1} parent=1 // pred_region
      %s1170 = ssub.s32 1024, 1024
      %1171 = vsyncadd [#allocation19], %s1170
      %s1172 = sshll.u32 [#allocation18], 4
      %s1173 = int_to_ptr.vmem [resolvable:$true] %s1172
      %1178 = dma.vmem_to_hbm [thread:$0]  %s1173, 1024, %s16, [#allocation19], 512, 512, 32
    $region105: #{tpu_custom_call.1} parent=1 // pred_fallthru
      _
    // Predicated region
    $region106: #{tpu_custom_call.1} parent=1 // pred_check
      _
    $region107: #{tpu_custom_call.1} parent=1 // pred_check_branch
      %1180 = sbr.rel (0) target = $region109
    $region108: #{tpu_custom_call.1} parent=1 // pred_region
      %1181 = dma.done [#allocation4], 1024
    $region109: #{tpu_custom_call.1} parent=1 // pred_fallthru
      _
    // Predicated region
    $region110: #{tpu_custom_call.1} parent=1 // pred_check
      _
    $region111: #{tpu_custom_call.1} parent=1 // pred_check_branch
      %1183 = sbr.rel (0) target = $region113
    $region112: #{tpu_custom_call.1} parent=1 // pred_region
      %1184 = dma.done [#allocation19], 1024
    $region113: #{tpu_custom_call.1} parent=1 // pred_fallthru
      _
    %1185 = vsyncpa [#allocation3], 1
    %1186 = vsyncpa [#allocation6], 1
    %1187 = vsyncpa [#allocation9], 1
    %1188 = vsyncpa [#allocation12], 1
    %1189 = vsyncpa [#allocation15], 1
    %1190 = vsyncpa [#allocation4], 1
    %1191 = vsyncpa [#allocation19], 1

</llo_original>
